<compile_context>
chip_gen: v5e
topology: v5e:2x2
jax: 0.10.0
libtpu: 0.0.40
codegen_flags: <defaults>
</compile_context>

<pallas_src>
import jax
import jax.numpy as jnp
from jax.experimental import pallas as pl
from jax.experimental.pallas import tpu as pltpu


# ---------------------------------------------------------------------------
# Pallas kernel: fc_rssi(+BN folded) -> relu -> fused concat/fc_features(+BN
# folded) -> relu -> lstm1 cell (i,g,o only) -> relu -> lstm2 cell -> relu ->
# fc_output.  Whole tile fits in VMEM.
# ---------------------------------------------------------------------------
def custom_lstm_kernel(
    bssid_ref, site_ref, rssi_ref,            # activations (bf16)
    w_rssi_ref, b_rssi_ref,                   # fc_rssi (BN folded), bias f32
    wf_b_ref, wf_s_ref, wf_r_ref, bf_ref,     # fc_features split (BN folded)
    w1_ref, b1_ref,                           # lstm1 input->gates [i,g,o]
    w2_ref, b2_ref,                           # lstm2 input->gates [i,g,o]
    wo_ref, bo_ref,                           # fc_output (f32)
    out_ref,
):
    f32 = jnp.float32
    bf16 = jnp.bfloat16
    sig = jax.nn.sigmoid

    # fc_rssi (BN already folded into weight/bias) -> relu
    r = jnp.dot(rssi_ref[...], w_rssi_ref[...], preferred_element_type=f32) + b_rssi_ref[...]
    r = jnp.maximum(r, 0.0)

    # cat([embd_bssid, embd_site, rssi_feat], -1) @ W_features == sum of split matmuls.
    # The K=2 site block is done as two VPU broadcast-FMAs instead of an MXU matmul
    # (a K=2 matmul burns a full weight push/pop for only 2 rows of accumulation).
    x = (jnp.dot(bssid_ref[...], wf_b_ref[...], preferred_element_type=f32)
         + jnp.dot(r.astype(bf16), wf_r_ref[...], preferred_element_type=f32)
         + bf_ref[...])
    site = site_ref[...].astype(f32)
    wf_s = wf_s_ref[...].astype(f32)
    x = x + site[:, 0:1] * wf_s[0:1, :] + site[:, 1:2] * wf_s[1:2, :]
    x = jnp.maximum(x, 0.0)                   # dropout (eval) == identity, then relu

    # lstm1: single step, h0 = c0 = 0, forget gate removed; gate layout [i, g, o]
    H1 = 128
    g = jnp.dot(x.astype(bf16), w1_ref[...], preferred_element_type=f32) + b1_ref[...]
    i = sig(g[:, 0:H1])
    gg = jnp.tanh(g[:, H1:2 * H1])
    o = sig(g[:, 2 * H1:3 * H1])
    h = o * jnp.tanh(i * gg)                  # c = i*g (f*c0 = 0)
    h = jnp.maximum(h, 0.0)

    # lstm2: single step, h0 = c0 = 0
    H2 = 16
    g = jnp.dot(h.astype(bf16), w2_ref[...], preferred_element_type=f32) + b2_ref[...]
    i = sig(g[:, 0:H2])
    gg = jnp.tanh(g[:, H2:2 * H2])
    o = sig(g[:, 2 * H2:3 * H2])
    h = o * jnp.tanh(i * gg)
    h = jnp.maximum(h, 0.0)

    # fc_output (tiny; kept f32)
    out_ref[...] = jnp.dot(h, wo_ref[...], preferred_element_type=f32) + bo_ref[...]


# ---------------------------------------------------------------------------
# Raw parameter construction (deterministic, PyTorch-equivalent shapes; weights
# stored transposed to (in, out) for x @ W inside the kernel).
# ---------------------------------------------------------------------------
def make_params(key, wifi_num, bssid_dim, site_id_dim, embedding_dim):
    feature_dim = 256
    we = wifi_num * embedding_dim
    ks = jax.random.split(key, 16)

    def nrm(k, shape, scale=0.05):
        return (scale * jax.random.normal(k, shape)).astype(jnp.float32)

    p = {}
    p["embd_bssid"] = nrm(ks[0], (bssid_dim, embedding_dim), 1.0)
    p["embd_site"] = nrm(ks[1], (site_id_dim, 2), 1.0)
    # fc_rssi: torch weight (W*E, W) -> store (W, W*E)
    p["fc_rssi_w"] = nrm(ks[2], (wifi_num, we))
    p["fc_rssi_b"] = nrm(ks[3], (we,))
    # bn_rssi (eval)
    p["bn_rssi_gamma"] = jnp.ones((we,), jnp.float32)
    p["bn_rssi_beta"] = jnp.zeros((we,), jnp.float32)
    p["bn_rssi_mean"] = jnp.zeros((we,), jnp.float32)
    p["bn_rssi_var"] = jnp.ones((we,), jnp.float32)
    # fc_features: torch weight (256, 2*W*E+2) -> transposed, split by concat blocks
    p["fc_feat_w_bssid"] = nrm(ks[4], (we, feature_dim))
    p["fc_feat_w_site"] = nrm(ks[5], (2, feature_dim))
    p["fc_feat_w_rssi"] = nrm(ks[6], (we, feature_dim))
    p["fc_feat_b"] = nrm(ks[7], (feature_dim,))
    # bn_features (eval)
    p["bn_feat_gamma"] = jnp.ones((feature_dim,), jnp.float32)
    p["bn_feat_beta"] = jnp.zeros((feature_dim,), jnp.float32)
    p["bn_feat_mean"] = jnp.zeros((feature_dim,), jnp.float32)
    p["bn_feat_var"] = jnp.ones((feature_dim,), jnp.float32)
    # lstm1: weight_ih_l0 (512, 256) -> (256, 512) [gate order i,f,g,o]; b_ih + b_hh
    p["lstm1_w_ih"] = nrm(ks[8], (feature_dim, 4 * 128))
    p["lstm1_b"] = nrm(ks[9], (4 * 128,)) + nrm(ks[10], (4 * 128,))
    # lstm2: weight_ih_l0 (64, 128) -> (128, 64); biases (64,)
    p["lstm2_w_ih"] = nrm(ks[11], (128, 4 * 16))
    p["lstm2_b"] = nrm(ks[12], (4 * 16,)) + nrm(ks[13], (4 * 16,))
    # fc_output: (3, 16) -> (16, 3)
    p["fc_out_w"] = nrm(ks[14], (16, 3))
    p["fc_out_b"] = nrm(ks[15], (3,))
    return p


# ---------------------------------------------------------------------------
# One-time parameter prep: fold eval-BN into the linears, drop the dead forget
# gate columns, cast big matmul weights to bf16.  Called once, outside jit.
# ---------------------------------------------------------------------------
def fold_params(p, eps=1e-5):
    bf16 = jnp.bfloat16
    f32 = jnp.float32

    s_rssi = p["bn_rssi_gamma"] * jax.lax.rsqrt(p["bn_rssi_var"] + eps)
    t_rssi = p["bn_rssi_beta"] - p["bn_rssi_mean"] * s_rssi
    s_feat = p["bn_feat_gamma"] * jax.lax.rsqrt(p["bn_feat_var"] + eps)
    t_feat = p["bn_feat_beta"] - p["bn_feat_mean"] * s_feat

    def drop_forget(w, b, H):  # torch gate order [i, f, g, o] -> keep [i, g, o]
        w2 = jnp.concatenate([w[:, 0:H], w[:, 2 * H:3 * H], w[:, 3 * H:4 * H]], axis=1)
        b2 = jnp.concatenate([b[0:H], b[2 * H:3 * H], b[3 * H:4 * H]])
        return w2, b2

    k = {}
    k["embd_bssid"] = p["embd_bssid"]
    k["embd_site"] = p["embd_site"]
    k["w_rssi"] = (p["fc_rssi_w"] * s_rssi[None, :]).astype(bf16)
    k["b_rssi"] = (p["fc_rssi_b"] * s_rssi + t_rssi).astype(f32)
    k["wf_b"] = (p["fc_feat_w_bssid"] * s_feat[None, :]).astype(bf16)
    k["wf_s"] = (p["fc_feat_w_site"] * s_feat[None, :]).astype(bf16)
    k["wf_r"] = (p["fc_feat_w_rssi"] * s_feat[None, :]).astype(bf16)
    k["bf"] = (p["fc_feat_b"] * s_feat + t_feat).astype(f32)
    w1, b1 = drop_forget(p["lstm1_w_ih"], p["lstm1_b"], 128)
    k["w1"], k["b1"] = w1.astype(bf16), b1.astype(f32)
    w2, b2 = drop_forget(p["lstm2_w_ih"], p["lstm2_b"], 16)
    k["w2"], k["b2"] = w2.astype(bf16), b2.astype(f32)
    k["wo"], k["bo"] = p["fc_out_w"], p["fc_out_b"]
    return k


# ---------------------------------------------------------------------------
# Wrapper: embedding gathers (fused into the call via allow_input_fusion) + one
# pallas_call.  For large batches, pass batch_tile (e.g. 512-2048) to get a
# pipelined, weight-resident grid with a "parallel" batch axis; keep at least
# 2 grid steps so both v7x TensorCores get work.
# ---------------------------------------------------------------------------
def custom_lstm_forward(kp, bssid_feats, site_id, rssi_feats, *, batch_tile=None):
    B = bssid_feats.shape[0]
    bf16 = jnp.bfloat16

    # Gathers stay in the wrapper but are fused INTO the pallas_call (see
    # allow_input_fusion below), so there is no separate XLA gather launch and
    # no (B, W*E) bf16 intermediate HBM round-trip.
    embd_bssid = jnp.take(kp["embd_bssid"], bssid_feats, axis=0).reshape(B, -1).astype(bf16)
    embd_site = jnp.take(kp["embd_site"], site_id, axis=0).astype(bf16)
    rssi = rssi_feats.astype(bf16)

    def row(v):  # (D,) -> (1, D) for in-kernel broadcasting
        return v.reshape(1, -1)

    acts = (embd_bssid, embd_site, rssi)
    weights = (
        kp["w_rssi"], row(kp["b_rssi"]),
        kp["wf_b"], kp["wf_s"], kp["wf_r"], row(kp["bf"]),
        kp["w1"], row(kp["b1"]),
        kp["w2"], row(kp["b2"]),
        kp["wo"], row(kp["bo"]),
    )
    inputs = acts + weights
    # Allow XLA to fuse the gather/reshape/cast producers of the 3 activation
    # operands into this call; weights are plain constants (no fusion needed).
    fuse = [True] * len(acts) + [False] * len(weights)

    # Advisory cost model for XLA's scheduler.
    we = embd_bssid.shape[1]
    wifi = rssi.shape[1]
    flops = 2 * B * (wifi * we + (2 * we + 2) * 256 + 256 * 384 + 128 * 48 + 16 * 3)
    trans = B * (2 * 128 + 2 * 128 + 2 * 16 + 2 * 16)
    bytes_accessed = sum(int(a.size) * a.dtype.itemsize for a in inputs) + B * 3 * 4
    cost = pl.CostEstimate(flops=flops, transcendentals=trans, bytes_accessed=bytes_accessed)

    out_shape = jax.ShapeDtypeStruct((B, 3), jnp.float32)

    if batch_tile is None or batch_tile >= B or B % batch_tile != 0:
        # Single-shot (latency) path: everything in VMEM, one grid point.
        vmem = pl.BlockSpec(memory_space=pltpu.MemorySpace.VMEM)
        return pl.pallas_call(
            custom_lstm_kernel,
            out_shape=out_shape,
            in_specs=[vmem] * len(inputs),
            out_specs=vmem,
            cost_estimate=cost,
            compiler_params=pltpu.CompilerParams(allow_input_fusion=fuse),
        )(*inputs)

    # Batch-tiled (throughput) path: activations/output tiled over batch, weights
    # resident (constant index_map -> fetched once), batch axis parallel so it
    # shards across both TensorCores on v7x.
    act_specs = [pl.BlockSpec((batch_tile, a.shape[1]), lambda b: (b, 0)) for a in acts]
    w_specs = [pl.BlockSpec(w.shape, lambda b: (0, 0)) for w in weights]
    out_spec = pl.BlockSpec((batch_tile, 3), lambda b: (b, 0))
    return pl.pallas_call(
        custom_lstm_kernel,
        out_shape=out_shape,
        grid=(B // batch_tile,),
        in_specs=act_specs + w_specs,
        out_specs=out_spec,
        cost_estimate=cost,
        compiler_params=pltpu.CompilerParams(
            dimension_semantics=("parallel",),
            allow_input_fusion=fuse,
        ),
    )(*inputs)


# ---------------------------------------------------------------------------
# Pure-JAX reference (f32, unfolded params) for correctness checking.
# ---------------------------------------------------------------------------
def reference_forward(p, bssid_feats, site_id, rssi_feats, eps=1e-5):
    B = bssid_feats.shape[0]
    eb = jnp.take(p["embd_bssid"], bssid_feats, axis=0).reshape(B, -1)
    es = jnp.take(p["embd_site"], site_id, axis=0)
    r = rssi_feats @ p["fc_rssi_w"] + p["fc_rssi_b"]
    r = (r - p["bn_rssi_mean"]) * jax.lax.rsqrt(p["bn_rssi_var"] + eps) * p["bn_rssi_gamma"] + p["bn_rssi_beta"]
    r = jnp.maximum(r, 0.0)
    x = jnp.concatenate([eb, es, r], axis=-1)
    wf = jnp.concatenate([p["fc_feat_w_bssid"], p["fc_feat_w_site"], p["fc_feat_w_rssi"]], axis=0)
    x = x @ wf + p["fc_feat_b"]
    x = (x - p["bn_feat_mean"]) * jax.lax.rsqrt(p["bn_feat_var"] + eps) * p["bn_feat_gamma"] + p["bn_feat_beta"]
    x = jnp.maximum(x, 0.0)

    def cell(x, w, b, H):
        g = x @ w + b
        i = jax.nn.sigmoid(g[:, 0:H])
        gg = jnp.tanh(g[:, 2 * H:3 * H])
        o = jax.nn.sigmoid(g[:, 3 * H:4 * H])
        return o * jnp.tanh(i * gg)  # f gate * c0 = 0

    h = jnp.maximum(cell(x, p["lstm1_w_ih"], p["lstm1_b"], 128), 0.0)
    h = jnp.maximum(cell(h, p["lstm2_w_ih"], p["lstm2_b"], 16), 0.0)
    return h @ p["fc_out_w"] + p["fc_out_b"]


if __name__ == "__main__":
    wifi_num = 20
    bssid_dim = 64
    site_id_dim = 8
    embedding_dim = 32
    batch = 8

    key = jax.random.PRNGKey(0)
    kp, kb, ks, kr, kb2, ks2, kr2 = jax.random.split(key, 7)

    raw_params = make_params(kp, wifi_num, bssid_dim, site_id_dim, embedding_dim)
    kparams = fold_params(raw_params)

    bssid_feats = jax.random.randint(kb, (batch, wifi_num), 0, bssid_dim, dtype=jnp.int32)
    site_id = jax.random.randint(ks, (batch,), 0, site_id_dim, dtype=jnp.int32)
    rssi_feats = jax.random.normal(kr, (batch, wifi_num), dtype=jnp.float32)

    # Small-batch (latency) path: single-shot kernel, gathers fused into the call.
    fwd = jax.jit(custom_lstm_forward)
    out = fwd(kparams, bssid_feats, site_id, rssi_feats)
    jax.block_until_ready(out)
    assert out.shape == (batch, 3), out.shape
    assert bool(jnp.all(jnp.isfinite(out)))
    ref = reference_forward(raw_params, bssid_feats, site_id, rssi_feats)
    assert bool(jnp.allclose(out, ref, atol=5e-2, rtol=5e-2)), float(jnp.max(jnp.abs(out - ref)))

    # Throughput path: batch-tiled grid (tile=512 -> 4 grid steps, so the
    # "parallel" batch axis still feeds both v7x TensorCores), weights VMEM-resident.
    B2 = 2048
    bssid2 = jax.random.randint(kb2, (B2, wifi_num), 0, bssid_dim, dtype=jnp.int32)
    site2 = jax.random.randint(ks2, (B2,), 0, site_id_dim, dtype=jnp.int32)
    rssi2 = jax.random.normal(kr2, (B2, wifi_num), dtype=jnp.float32)
    fwd_tiled = jax.jit(lambda p, a, b, c: custom_lstm_forward(p, a, b, c, batch_tile=512))
    out2 = fwd_tiled(kparams, bssid2, site2, rssi2)
    jax.block_until_ready(out2)
    assert out2.shape == (B2, 3), out2.shape
    ref2 = reference_forward(raw_params, bssid2, site2, rssi2)
    assert bool(jnp.allclose(out2, ref2, atol=5e-2, rtol=5e-2)), float(jnp.max(jnp.abs(out2 - ref2)))

    print("KERNEL_OK")
</pallas_src>

<mosaic_0001>
module attributes {stable_mosaic.version = 11 : i64} {
  func.func @custom_lstm_kernel(%arg0: memref<8x640xbf16, #tpu.memory_space<vmem>>, %arg1: memref<8x2xbf16, #tpu.memory_space<vmem>>, %arg2: memref<8x20xbf16, #tpu.memory_space<vmem>>, %arg3: memref<20x640xbf16, #tpu.memory_space<vmem>>, %arg4: memref<1x640xf32, #tpu.memory_space<vmem>>, %arg5: memref<640x256xbf16, #tpu.memory_space<vmem>>, %arg6: memref<2x256xbf16, #tpu.memory_space<vmem>>, %arg7: memref<640x256xbf16, #tpu.memory_space<vmem>>, %arg8: memref<1x256xf32, #tpu.memory_space<vmem>>, %arg9: memref<256x384xbf16, #tpu.memory_space<vmem>>, %arg10: memref<1x384xf32, #tpu.memory_space<vmem>>, %arg11: memref<128x48xbf16, #tpu.memory_space<vmem>>, %arg12: memref<1x48xf32, #tpu.memory_space<vmem>>, %arg13: memref<16x3xf32, #tpu.memory_space<vmem>>, %arg14: memref<1x3xf32, #tpu.memory_space<vmem>>, %arg15: memref<8x3xf32, #tpu.memory_space<vmem>>) attributes {dimension_semantics = [], scalar_prefetch = 0 : i64, scratch_operands = 0 : i64, tpu.core_type = #tpu.core_type<tc>} {
    %c0 = arith.constant 0 : index
    %c0_0 = arith.constant 0 : index
    %0 = vector.load %arg2[%c0, %c0_0] : memref<8x20xbf16, #tpu.memory_space<vmem>>, vector<8x20xbf16>
    %c0_1 = arith.constant 0 : index
    %c0_2 = arith.constant 0 : index
    %1 = vector.load %arg3[%c0_1, %c0_2] : memref<20x640xbf16, #tpu.memory_space<vmem>>, vector<20x640xbf16>
    %cst = arith.constant dense<0.000000e+00> : vector<8x640xf32>
    %2 = tpu.matmul %0, %1, %cst {dimension_numbers = #tpu.dot_dimension_numbers<[1], [0], [0], [1], [0, 0, 1, 1], [], []>} : vector<8x20xbf16>, vector<20x640xbf16>, vector<8x640xf32> -> vector<8x640xf32>
    %c0_3 = arith.constant 0 : index
    %c0_4 = arith.constant 0 : index
    %3 = vector.load %arg4[%c0_3, %c0_4] : memref<1x640xf32, #tpu.memory_space<vmem>>, vector<1x640xf32>
    %4 = vector.broadcast %3 : vector<1x640xf32> to vector<8x640xf32>
    %5 = arith.addf %2, %4 : vector<8x640xf32>
    %cst_5 = arith.constant 0.000000e+00 : f32
    %6 = vector.broadcast %cst_5 : f32 to vector<8x640xf32>
    %7 = arith.maximumf %5, %6 : vector<8x640xf32>
    %c0_6 = arith.constant 0 : index
    %c0_7 = arith.constant 0 : index
    %8 = vector.load %arg0[%c0_6, %c0_7] : memref<8x640xbf16, #tpu.memory_space<vmem>>, vector<8x640xbf16>
    %c0_8 = arith.constant 0 : index
    %c0_9 = arith.constant 0 : index
    %9 = vector.load %arg5[%c0_8, %c0_9] : memref<640x256xbf16, #tpu.memory_space<vmem>>, vector<640x256xbf16>
    %cst_10 = arith.constant dense<0.000000e+00> : vector<8x256xf32>
    %10 = tpu.matmul %8, %9, %cst_10 {dimension_numbers = #tpu.dot_dimension_numbers<[1], [0], [0], [1], [0, 0, 1, 1], [], []>} : vector<8x640xbf16>, vector<640x256xbf16>, vector<8x256xf32> -> vector<8x256xf32>
    %11 = arith.truncf %7 : vector<8x640xf32> to vector<8x640xbf16>
    %c0_11 = arith.constant 0 : index
    %c0_12 = arith.constant 0 : index
    %12 = vector.load %arg7[%c0_11, %c0_12] : memref<640x256xbf16, #tpu.memory_space<vmem>>, vector<640x256xbf16>
    %cst_13 = arith.constant dense<0.000000e+00> : vector<8x256xf32>
    %13 = tpu.matmul %11, %12, %cst_13 {dimension_numbers = #tpu.dot_dimension_numbers<[1], [0], [0], [1], [0, 0, 1, 1], [], []>} : vector<8x640xbf16>, vector<640x256xbf16>, vector<8x256xf32> -> vector<8x256xf32>
    %14 = arith.addf %10, %13 : vector<8x256xf32>
    %c0_14 = arith.constant 0 : index
    %c0_15 = arith.constant 0 : index
    %15 = vector.load %arg8[%c0_14, %c0_15] : memref<1x256xf32, #tpu.memory_space<vmem>>, vector<1x256xf32>
    %16 = vector.broadcast %15 : vector<1x256xf32> to vector<8x256xf32>
    %17 = arith.addf %14, %16 : vector<8x256xf32>
    %c0_16 = arith.constant 0 : index
    %c0_17 = arith.constant 0 : index
    %18 = vector.load %arg1[%c0_16, %c0_17] : memref<8x2xbf16, #tpu.memory_space<vmem>>, vector<8x2xbf16>
    %19 = arith.extf %18 : vector<8x2xbf16> to vector<8x2xf32>
    %c0_18 = arith.constant 0 : index
    %c0_19 = arith.constant 0 : index
    %20 = vector.load %arg6[%c0_18, %c0_19] : memref<2x256xbf16, #tpu.memory_space<vmem>>, vector<2x256xbf16>
    %21 = arith.extf %20 : vector<2x256xbf16> to vector<2x256xf32>
    %22 = vector.extract_strided_slice %19 {offsets = [0, 0], sizes = [8, 1], strides = [1, 1]} : vector<8x2xf32> to vector<8x1xf32>
    %23 = vector.extract_strided_slice %21 {offsets = [0, 0], sizes = [1, 256], strides = [1, 1]} : vector<2x256xf32> to vector<1x256xf32>
    %24 = vector.broadcast %22 : vector<8x1xf32> to vector<8x256xf32>
    %25 = vector.broadcast %23 : vector<1x256xf32> to vector<8x256xf32>
    %26 = arith.mulf %24, %25 : vector<8x256xf32>
    %27 = arith.addf %17, %26 : vector<8x256xf32>
    %28 = vector.extract_strided_slice %19 {offsets = [0, 1], sizes = [8, 1], strides = [1, 1]} : vector<8x2xf32> to vector<8x1xf32>
    %29 = vector.extract_strided_slice %21 {offsets = [1, 0], sizes = [1, 256], strides = [1, 1]} : vector<2x256xf32> to vector<1x256xf32>
    %30 = vector.broadcast %28 : vector<8x1xf32> to vector<8x256xf32>
    %31 = vector.broadcast %29 : vector<1x256xf32> to vector<8x256xf32>
    %32 = arith.mulf %30, %31 : vector<8x256xf32>
    %33 = arith.addf %27, %32 : vector<8x256xf32>
    %cst_20 = arith.constant 0.000000e+00 : f32
    %34 = vector.broadcast %cst_20 : f32 to vector<8x256xf32>
    %35 = arith.maximumf %33, %34 : vector<8x256xf32>
    %36 = arith.truncf %35 : vector<8x256xf32> to vector<8x256xbf16>
    %c0_21 = arith.constant 0 : index
    %c0_22 = arith.constant 0 : index
    %37 = vector.load %arg9[%c0_21, %c0_22] : memref<256x384xbf16, #tpu.memory_space<vmem>>, vector<256x384xbf16>
    %cst_23 = arith.constant dense<0.000000e+00> : vector<8x384xf32>
    %38 = tpu.matmul %36, %37, %cst_23 {dimension_numbers = #tpu.dot_dimension_numbers<[1], [0], [0], [1], [0, 0, 1, 1], [], []>} : vector<8x256xbf16>, vector<256x384xbf16>, vector<8x384xf32> -> vector<8x384xf32>
    %c0_24 = arith.constant 0 : index
    %c0_25 = arith.constant 0 : index
    %39 = vector.load %arg10[%c0_24, %c0_25] : memref<1x384xf32, #tpu.memory_space<vmem>>, vector<1x384xf32>
    %40 = vector.broadcast %39 : vector<1x384xf32> to vector<8x384xf32>
    %41 = arith.addf %38, %40 : vector<8x384xf32>
    %42 = vector.extract_strided_slice %41 {offsets = [0, 0], sizes = [8, 128], strides = [1, 1]} : vector<8x384xf32> to vector<8x128xf32>
    %43 = arith.negf %42 : vector<8x128xf32>
    %44 = math.exp %43 : vector<8x128xf32>
    %cst_26 = arith.constant 1.000000e+00 : f32
    %45 = vector.broadcast %cst_26 : f32 to vector<8x128xf32>
    %46 = arith.addf %45, %44 : vector<8x128xf32>
    %47 = arith.divf %45, %46 : vector<8x128xf32>
    %48 = vector.extract_strided_slice %41 {offsets = [0, 128], sizes = [8, 128], strides = [1, 1]} : vector<8x384xf32> to vector<8x128xf32>
    %49 = math.tanh %48 : vector<8x128xf32>
    %50 = vector.extract_strided_slice %41 {offsets = [0, 256], sizes = [8, 128], strides = [1, 1]} : vector<8x384xf32> to vector<8x128xf32>
    %51 = arith.negf %50 : vector<8x128xf32>
    %52 = math.exp %51 : vector<8x128xf32>
    %cst_27 = arith.constant 1.000000e+00 : f32
    %53 = vector.broadcast %cst_27 : f32 to vector<8x128xf32>
    %54 = arith.addf %53, %52 : vector<8x128xf32>
    %55 = arith.divf %53, %54 : vector<8x128xf32>
    %56 = arith.mulf %47, %49 : vector<8x128xf32>
    %57 = math.tanh %56 : vector<8x128xf32>
    %58 = arith.mulf %55, %57 : vector<8x128xf32>
    %cst_28 = arith.constant 0.000000e+00 : f32
    %59 = vector.broadcast %cst_28 : f32 to vector<8x128xf32>
    %60 = arith.maximumf %58, %59 : vector<8x128xf32>
    %61 = arith.truncf %60 : vector<8x128xf32> to vector<8x128xbf16>
    %c0_29 = arith.constant 0 : index
    %c0_30 = arith.constant 0 : index
    %62 = vector.load %arg11[%c0_29, %c0_30] : memref<128x48xbf16, #tpu.memory_space<vmem>>, vector<128x48xbf16>
    %cst_31 = arith.constant dense<0.000000e+00> : vector<8x48xf32>
    %63 = tpu.matmul %61, %62, %cst_31 {dimension_numbers = #tpu.dot_dimension_numbers<[1], [0], [0], [1], [0, 0, 1, 1], [], []>} : vector<8x128xbf16>, vector<128x48xbf16>, vector<8x48xf32> -> vector<8x48xf32>
    %c0_32 = arith.constant 0 : index
    %c0_33 = arith.constant 0 : index
    %64 = vector.load %arg12[%c0_32, %c0_33] : memref<1x48xf32, #tpu.memory_space<vmem>>, vector<1x48xf32>
    %65 = vector.broadcast %64 : vector<1x48xf32> to vector<8x48xf32>
    %66 = arith.addf %63, %65 : vector<8x48xf32>
    %67 = vector.extract_strided_slice %66 {offsets = [0, 0], sizes = [8, 16], strides = [1, 1]} : vector<8x48xf32> to vector<8x16xf32>
    %68 = arith.negf %67 : vector<8x16xf32>
    %69 = math.exp %68 : vector<8x16xf32>
    %cst_34 = arith.constant 1.000000e+00 : f32
    %70 = vector.broadcast %cst_34 : f32 to vector<8x16xf32>
    %71 = arith.addf %70, %69 : vector<8x16xf32>
    %72 = arith.divf %70, %71 : vector<8x16xf32>
    %73 = vector.extract_strided_slice %66 {offsets = [0, 16], sizes = [8, 16], strides = [1, 1]} : vector<8x48xf32> to vector<8x16xf32>
    %74 = math.tanh %73 : vector<8x16xf32>
    %75 = vector.extract_strided_slice %66 {offsets = [0, 32], sizes = [8, 16], strides = [1, 1]} : vector<8x48xf32> to vector<8x16xf32>
    %76 = arith.negf %75 : vector<8x16xf32>
    %77 = math.exp %76 : vector<8x16xf32>
    %cst_35 = arith.constant 1.000000e+00 : f32
    %78 = vector.broadcast %cst_35 : f32 to vector<8x16xf32>
    %79 = arith.addf %78, %77 : vector<8x16xf32>
    %80 = arith.divf %78, %79 : vector<8x16xf32>
    %81 = arith.mulf %72, %74 : vector<8x16xf32>
    %82 = math.tanh %81 : vector<8x16xf32>
    %83 = arith.mulf %80, %82 : vector<8x16xf32>
    %cst_36 = arith.constant 0.000000e+00 : f32
    %84 = vector.broadcast %cst_36 : f32 to vector<8x16xf32>
    %85 = arith.maximumf %83, %84 : vector<8x16xf32>
    %c0_37 = arith.constant 0 : index
    %c0_38 = arith.constant 0 : index
    %86 = vector.load %arg13[%c0_37, %c0_38] : memref<16x3xf32, #tpu.memory_space<vmem>>, vector<16x3xf32>
    %cst_39 = arith.constant dense<0.000000e+00> : vector<8x3xf32>
    %87 = tpu.matmul %85, %86, %cst_39 {dimension_numbers = #tpu.dot_dimension_numbers<[1], [0], [0], [1], [0, 0, 1, 1], [], []>} : vector<8x16xf32>, vector<16x3xf32>, vector<8x3xf32> -> vector<8x3xf32>
    %c0_40 = arith.constant 0 : index
    %c0_41 = arith.constant 0 : index
    %88 = vector.load %arg14[%c0_40, %c0_41] : memref<1x3xf32, #tpu.memory_space<vmem>>, vector<1x3xf32>
    %89 = vector.broadcast %88 : vector<1x3xf32> to vector<8x3xf32>
    %90 = arith.addf %87, %89 : vector<8x3xf32>
    %c0_42 = arith.constant 0 : index
    %c0_43 = arith.constant 0 : index
    %91 = vector.load %arg15[%c0_42, %c0_43] : memref<8x3xf32, #tpu.memory_space<vmem>>, vector<8x3xf32>
    tpu.vector_store %arg15[%c0_42, %c0_43], %90 {strides = array<i32>} : memref<8x3xf32, #tpu.memory_space<vmem>>, vector<8x3xf32>,
    return
  }
}

</mosaic_0001>

<llo_original>
// kernel: custom_lstm_forward.2
$region0: #{custom_lstm_forward.2}
  #allocation0 [shape = 'u32[]', space=smem, size = 0x4, offset = 0x4, fixed_abs, tag = 'smem constant byte address 0x4 - core index']
  #allocation1 [shape = 'u32[72,128]{1,0:T(1,128)}', space=vmem, size = 0x9000, scoped, tag = 'internal scratch']
  %s0 = inlined_call_operand.vmem [shape: bf16[8,640], index: 0, kind: input, shape index: {}]
  %s1 = inlined_call_operand.vmem [shape: bf16[20,640], index: 1, kind: input, shape index: {}]
  %s2 = inlined_call_operand.vmem [shape: f32[1,640], index: 2, kind: input, shape index: {}]
  %s3 = inlined_call_operand.vmem [shape: bf16[640,256], index: 3, kind: input, shape index: {}]
  %s4 = inlined_call_operand.vmem [shape: bf16[2,256], index: 4, kind: input, shape index: {}]
  %s5 = inlined_call_operand.vmem [shape: bf16[640,256], index: 5, kind: input, shape index: {}]
  %s6 = inlined_call_operand.vmem [shape: f32[1,256], index: 6, kind: input, shape index: {}]
  %s7 = inlined_call_operand.vmem [shape: bf16[256,384], index: 7, kind: input, shape index: {}]
  %s8 = inlined_call_operand.vmem [shape: f32[1,384], index: 8, kind: input, shape index: {}]
  %s9 = inlined_call_operand.vmem [shape: bf16[128,48], index: 9, kind: input, shape index: {}]
  %s10 = inlined_call_operand.vmem [shape: f32[1,48], index: 10, kind: input, shape index: {}]
  %s11 = inlined_call_operand.vmem [shape: f32[16,3], index: 11, kind: input, shape index: {}]
  %s12 = inlined_call_operand.vmem [shape: f32[1,3], index: 12, kind: input, shape index: {}]
  %s13 = inlined_call_operand.vmem [shape: bf16[8,2], index: 13, kind: input, shape index: {}]
  %s14 = inlined_call_operand.<no memory space> [shape: bf16[], index: 14, kind: input, shape index: {}]
  %s15 = inlined_call_operand.vmem [shape: f32[8,20], index: 15, kind: input, shape index: {}]
  %s16 = inlined_call_operand.vmem [shape: pred[8], index: 16, kind: input, shape index: {}]
  %s17 = inlined_call_operand.vmem [shape: f32[8,3], index: 17, kind: output, shape index: {}]
  %s18 = sld [smem:[#allocation0]]
  $region74: #{custom_lstm_forward.2} parent=0
    _
  %s20 = ssub.s32 1, %s18
  %s21 = scalar_select 0, %s20, %s18
  %v22 = vstv %s14
  %v23 = vunpack.i.l.bf16 %v22
  %v25 = vunpack.i.h.bf16 %v22
  $region1: #{custom_lstm_forward.2} parent=0
    #allocation2 [shape = 'u8[2048]{0}', space=vmem, size = 0x800, dematerialized = true, scoped, tag = 'FusionAdapter Buffer %select_convert_fusion.1 = bf16[8,2]{1,0:T(8,128)(2,1)} fusion(%param_13.3, %param_14.3, %param_16.3), kind=kLoop, calls=%fused_computation.7.clone.clone, metadata={op_name="jit(custom_lstm_forward)/convert_element_type" stack_frame_id=10}']
    #allocation3 [shape = 'u8[2048]{0}', space=vmem, size = 0x800, dematerialized = true, scoped, tag = 'FusionAdapter Buffer %fusion.3 = bf16[8,20]{1,0:T(8,128)(2,1)} fusion(%param_15.2), kind=kLoop, calls=%fused_computation.12.clone, metadata={op_name="jit(custom_lstm_forward)/convert_element_type" stack_frame_id=11}']
    // Predicated region
    $region2: #{custom_lstm_forward.2} parent=1 // pred_check
      _
    $region3: #{custom_lstm_forward.2} parent=1 // pred_check_branch
      %28 = sbr.rel (0) target = $region5
    $region4: #{custom_lstm_forward.2} parent=1 // pred_region
      _
    $region5: #{custom_lstm_forward.2} parent=1 // pred_fallthru
      _
    // Predicated region
    $region6: #{custom_lstm_forward.2} parent=1 // pred_check
      _
    $region7: #{custom_lstm_forward.2} parent=1 // pred_check_branch
      %30 = sbr.rel (0) target = $region9
    $region8: #{custom_lstm_forward.2} parent=1 // pred_region
      _
    $region9: #{custom_lstm_forward.2} parent=1 // pred_fallthru
      _
    // Predicated region
    $region10: #{custom_lstm_forward.2} parent=1 // pred_check
      _
    $region11: #{custom_lstm_forward.2} parent=1 // pred_check_branch
      %32 = sbr.rel (0) target = $region13
    $region12: #{custom_lstm_forward.2} parent=1 // pred_region
      _
    $region13: #{custom_lstm_forward.2} parent=1 // pred_fallthru
      _
    // Predicated region
    $region14: #{custom_lstm_forward.2} parent=1 // pred_check
      _
    $region15: #{custom_lstm_forward.2} parent=1 // pred_check_branch
      %34 = sbr.rel (0) target = $region17
    $region16: #{custom_lstm_forward.2} parent=1 // pred_region
      _
    $region17: #{custom_lstm_forward.2} parent=1 // pred_fallthru
      _
    // Predicated region
    $region18: #{custom_lstm_forward.2} parent=1 // pred_check
      _
    $region19: #{custom_lstm_forward.2} parent=1 // pred_check_branch
      %36 = sbr.rel (0) target = $region21
    $region20: #{custom_lstm_forward.2} parent=1 // pred_region
      _
    $region21: #{custom_lstm_forward.2} parent=1 // pred_fallthru
      _
    // Predicated region
    $region22: #{custom_lstm_forward.2} parent=1 // pred_check
      _
    $region23: #{custom_lstm_forward.2} parent=1 // pred_check_branch
      %38 = sbr.rel (0) target = $region25
    $region24: #{custom_lstm_forward.2} parent=1 // pred_region
      _
    $region25: #{custom_lstm_forward.2} parent=1 // pred_fallthru
      _
    // Predicated region
    $region26: #{custom_lstm_forward.2} parent=1 // pred_check
      _
    $region27: #{custom_lstm_forward.2} parent=1 // pred_check_branch
      %40 = sbr.rel (0) target = $region29
    $region28: #{custom_lstm_forward.2} parent=1 // pred_region
      _
    $region29: #{custom_lstm_forward.2} parent=1 // pred_fallthru
      _
    // Predicated region
    $region30: #{custom_lstm_forward.2} parent=1 // pred_check
      _
    $region31: #{custom_lstm_forward.2} parent=1 // pred_check_branch
      %42 = sbr.rel (0) target = $region33
    $region32: #{custom_lstm_forward.2} parent=1 // pred_region
      _
    $region33: #{custom_lstm_forward.2} parent=1 // pred_fallthru
      _
    // Predicated region
    $region34: #{custom_lstm_forward.2} parent=1 // pred_check
      _
    $region35: #{custom_lstm_forward.2} parent=1 // pred_check_branch
      %44 = sbr.rel (0) target = $region37
    $region36: #{custom_lstm_forward.2} parent=1 // pred_region
      _
    $region37: #{custom_lstm_forward.2} parent=1 // pred_fallthru
      _
    // Predicated region
    $region38: #{custom_lstm_forward.2} parent=1 // pred_check
      _
    $region39: #{custom_lstm_forward.2} parent=1 // pred_check_branch
      %46 = sbr.rel (0) target = $region41
    $region40: #{custom_lstm_forward.2} parent=1 // pred_region
      _
    $region41: #{custom_lstm_forward.2} parent=1 // pred_fallthru
      _
    // Predicated region
    $region42: #{custom_lstm_forward.2} parent=1 // pred_check
      _
    $region43: #{custom_lstm_forward.2} parent=1 // pred_check_branch
      %48 = sbr.rel (0) target = $region45
    $region44: #{custom_lstm_forward.2} parent=1 // pred_region
      _
    $region45: #{custom_lstm_forward.2} parent=1 // pred_fallthru
      _
    // Predicated region
    $region46: #{custom_lstm_forward.2} parent=1 // pred_check
      _
    $region47: #{custom_lstm_forward.2} parent=1 // pred_check_branch
      %50 = sbr.rel (0) target = $region49
    $region48: #{custom_lstm_forward.2} parent=1 // pred_region
      _
    $region49: #{custom_lstm_forward.2} parent=1 // pred_fallthru
      _
    // Predicated region
    $region50: #{custom_lstm_forward.2} parent=1 // pred_check
      _
    $region51: #{custom_lstm_forward.2} parent=1 // pred_check_branch
      %52 = sbr.rel (0) target = $region53
    $region52: #{custom_lstm_forward.2} parent=1 // pred_region
      _
    $region53: #{custom_lstm_forward.2} parent=1 // pred_fallthru
      _
    // Predicated region
    $region54: #{custom_lstm_forward.2} parent=1 // pred_check
      _
    $region55: #{custom_lstm_forward.2} parent=1 // pred_check_branch
      %54 = sbr.rel (0) target = $region57
    $region56: #{custom_lstm_forward.2} parent=1 // pred_region
      _
    $region57: #{custom_lstm_forward.2} parent=1 // pred_fallthru
      _
    // Predicated region
    $region58: #{custom_lstm_forward.2} parent=1 // pred_check
      _
    $region59: #{custom_lstm_forward.2} parent=1 // pred_check_branch
      %56 = sbr.rel (0) target = $region61
    $region60: #{custom_lstm_forward.2} parent=1 // pred_region
      _
    $region61: #{custom_lstm_forward.2} parent=1 // pred_fallthru
      _
    // Predicated region
    $region62: #{custom_lstm_forward.2} parent=1 // pred_check
      _
    $region63: #{custom_lstm_forward.2} parent=1 // pred_check_branch
      %58 = sbr.rel (0) target = $region65
    $region64: #{custom_lstm_forward.2} parent=1 // pred_region
      _
    $region65: #{custom_lstm_forward.2} parent=1 // pred_fallthru
      _
    %v59 = vld [vmem:[%s13] sm:$0xf]
    %v60 = vunpack.c.l.bf16 %v59
    %v61 = vunpack.c.h.bf16 %v59
    %v62 = vld [vmem:[%s16] ss:$0 sm:$0xff]
    %v64 = vshra.s32 %v62, 0
    %v65 = vand.u32 %v64, 255
    %v66 = vlaneseq
    %v67 = vshrl.u32 %v66, 7
    %69 = vset.pattern.permute.xlu0 %v67
    %70 = vperm.xlu0 %69, %v65
    %v71 = vpop.permute.xlu0 %70
    %72 = xla_tuple %v71, %v60, %v23
    %73 = xla_tuple %72
    %vm74 = vcmp.ne.s32.totalorder %v71, 0
    %v75 = vsel %vm74, %v60, %v23
    %76 = xla_tuple %v75
    %v77 = vpack.c.bf16 0.0, %v75
    %s79 = ssub.s32 16, 1
    %80 = vst [vmem:[#allocation2] sm:%s79] %v77
    %v81 = vld [vmem:[%s15] sm:$0xff]
    %82 = xla_tuple %v81
    %83 = xla_tuple %82
    %84 = xla_tuple %v81
    %v85 = vpack.c.bf16 0.0, %v81
    %s87 = ssub.s32 16, 1
    %88 = vst [vmem:[#allocation3] sm:%s87] %v85
    %v90 = vld [vmem:[#allocation3] sm:$0xf]
    %v91 = vld [vmem:[%s1] sm:$0xff]
    %v92 = vld [vmem:[%s1 + $0x8] sm:$0xff]
    %v93 = vld [vmem:[%s1 + $0x10] sm:$0xf]
    %v94 = vld [vmem:[%s1 + $0x14] sm:$0xff]
    %v95 = vld [vmem:[%s1 + $0x1c] sm:$0xff]
    %v96 = vld [vmem:[%s1 + $0x24] sm:$0xf]
    %v97 = vld [vmem:[%s1 + $0x28] sm:$0x33]
    %v98 = vld [vmem:[%s1 + $0x30] sm:$0x33]
    %v99 = vld [vmem:[%s1 + $0x38] sm:$0x3]
    %v100 = vld [vmem:[%s2] sm:$0x1f]
    %v102 = vperm.slane %v100, 0
    %v103 = vperm.slane %v100, 1
    %v104 = vperm.slane %v100, 2
    %v105 = vperm.slane %v100, 3
    %v106 = vperm.slane %v100, 4
    %v121 = vunpack.c.l.b16 %v91
    %v122 = vunpack.c.h.b16 %v91
    %v123 = vunpack.c.l.b16 %v92
    %v124 = vunpack.c.h.b16 %v92
    %v125 = vunpack.c.l.b16 %v93
    %v126 = vunpack.c.l.b16 %v94
    %v127 = vunpack.c.h.b16 %v94
    %v128 = vunpack.c.l.b16 %v95
    %v129 = vunpack.c.h.b16 %v95
    %v130 = vunpack.c.l.b16 %v96
    %v131 = vunpack.c.l.b16 %v97
    %v132 = vunpack.c.h.b16 %v97
    %v133 = vunpack.c.l.b16 %v98
    %v134 = vunpack.c.h.b16 %v98
    %v135 = vunpack.c.l.b16 %v99
    %v136 = vpack.c.b16 %v126, %v121
    %v137 = vpack.c.b16 %v127, %v122
    %v138 = vpack.c.b16 %v128, %v123
    %v139 = vpack.c.b16 %v129, %v124
    %v140 = vpack.c.b16 %v130, %v125
    %v141 = vpack.c.b16 %v131, %v131
    %v142 = vpack.c.b16 %v132, %v132
    %v143 = vpack.c.b16 %v133, %v133
    %v144 = vpack.c.b16 %v134, %v134
    %v145 = vpack.c.b16 %v135, %v135
    %vm151 = vcmask 162816
    %v153 = vsel %vm151, %v90, 0
    %vm155 = vcmask 1041408
    %v157 = vsel %vm155, %v141, 0
    %v160 = vsel %vm155, %v142, 0
    %v163 = vsel %vm155, %v143, 0
    %v166 = vsel %vm155, %v144, 0
    %v169 = vsel %vm155, %v145, 0
    %171 = vmatpush.bf16.msra.mxu0 0
    %172 = vmatpush.bf16.msra.mxu0 0
    %173 = vmatpush.bf16.msra.mxu0 0
    %174 = vmatpush.bf16.msra.mxu0 0
    %175 = vmatpush.bf16.msra.mxu0 0
    %176 = vmatpush.bf16.msra.mxu0 0
    %177 = vmatpush.bf16.msra.mxu0 %v157
    %178 = vmatpush.bf16.msra.mxu0 %v136
    %179 = vmatmul.bf16.gmra.mxu0 %v153
    %v180 = vpop.f32.mrf.mxu0
    %v181 = vadd.f32 %v102, %v180
    %v182 = vpop.f32.mrf.mxu0
    %183 = vdwg.mxu0
    %184 = vmatpush.bf16.msra.mxu0 0
    %185 = vmatpush.bf16.msra.mxu0 0
    %186 = vmatpush.bf16.msra.mxu0 0
    %187 = vmatpush.bf16.msra.mxu0 0
    %188 = vmatpush.bf16.msra.mxu0 0
    %189 = vmatpush.bf16.msra.mxu0 0
    %190 = vmatpush.bf16.msra.mxu0 %v160
    %191 = vmatpush.bf16.msra.mxu0 %v137
    %192 = vmatmul.bf16.gmra.mxu0 %v153
    %v193 = vpop.f32.mrf.mxu0
    %v194 = vadd.f32 %v103, %v193
    %v195 = vpop.f32.mrf.mxu0
    %196 = vdwg.mxu0
    %197 = vmatpush.bf16.msra.mxu0 0
    %198 = vmatpush.bf16.msra.mxu0 0
    %199 = vmatpush.bf16.msra.mxu0 0
    %200 = vmatpush.bf16.msra.mxu0 0
    %201 = vmatpush.bf16.msra.mxu0 0
    %202 = vmatpush.bf16.msra.mxu0 0
    %203 = vmatpush.bf16.msra.mxu0 %v163
    %204 = vmatpush.bf16.msra.mxu0 %v138
    %205 = vmatmul.bf16.gmra.mxu0 %v153
    %v206 = vpop.f32.mrf.mxu0
    %v207 = vadd.f32 %v104, %v206
    %v208 = vpop.f32.mrf.mxu0
    %209 = vdwg.mxu0
    %210 = vmatpush.bf16.msra.mxu0 0
    %211 = vmatpush.bf16.msra.mxu0 0
    %212 = vmatpush.bf16.msra.mxu0 0
    %213 = vmatpush.bf16.msra.mxu0 0
    %214 = vmatpush.bf16.msra.mxu0 0
    %215 = vmatpush.bf16.msra.mxu0 0
    %216 = vmatpush.bf16.msra.mxu0 %v166
    %217 = vmatpush.bf16.msra.mxu0 %v139
    %218 = vmatmul.bf16.gmra.mxu0 %v153
    %v219 = vpop.f32.mrf.mxu0
    %v220 = vadd.f32 %v105, %v219
    %v221 = vpop.f32.mrf.mxu0
    %222 = vdwg.mxu0
    %223 = vmatpush.bf16.msra.mxu0 0
    %224 = vmatpush.bf16.msra.mxu0 0
    %225 = vmatpush.bf16.msra.mxu0 0
    %226 = vmatpush.bf16.msra.mxu0 0
    %227 = vmatpush.bf16.msra.mxu0 0
    %228 = vmatpush.bf16.msra.mxu0 0
    %229 = vmatpush.bf16.msra.mxu0 %v169
    %230 = vmatpush.bf16.msra.mxu0 %v140
    %231 = vmatmul.bf16.gmra.mxu0 %v153
    %v232 = vpop.f32.mrf.mxu0
    %v233 = vadd.f32 %v106, %v232
    %v234 = vpop.f32.mrf.mxu0
    %235 = vdwg.mxu0
    %v236 = vmax.f32 %v181, 0.0
    %v237 = vmax.f32 %v194, 0.0
    %v238 = vmax.f32 %v207, 0.0
    %v239 = vmax.f32 %v220, 0.0
    %v240 = vmax.f32 %v233, 0.0
    %v241 = vld [vmem:[%s0] sm:$0xff]
    %v242 = vld [vmem:[%s0 + $0x8] sm:$0xff]
    %v243 = vld [vmem:[%s0 + $0x10] sm:$0xf]
    %v244 = vld [vmem:[%s3] sm:$0xff]
    %v245 = vld [vmem:[%s3 + $0x8] sm:$0xff]
    %v246 = vld [vmem:[%s3 + $0x10] sm:$0xff]
    %v247 = vld [vmem:[%s3 + $0x18] sm:$0xff]
    %v248 = vld [vmem:[%s3 + $0x20] sm:$0xff]
    %v249 = vld [vmem:[%s3 + $0x28] sm:$0xff]
    %v250 = vld [vmem:[%s3 + $0x30] sm:$0xff]
    %v251 = vld [vmem:[%s3 + $0x38] sm:$0xff]
    %v252 = vld [vmem:[%s3 + $0x40] sm:$0xff]
    %v253 = vld [vmem:[%s3 + $0x48] sm:$0xff]
    %v254 = vld [vmem:[%s3 + $0x50] sm:$0xff]
    %v255 = vld [vmem:[%s3 + $0x58] sm:$0xff]
    %v256 = vld [vmem:[%s3 + $0x60] sm:$0xff]
    %v257 = vld [vmem:[%s3 + $0x68] sm:$0xff]
    %v258 = vld [vmem:[%s3 + $0x70] sm:$0xff]
    %v259 = vld [vmem:[%s3 + $0x78] sm:$0xff]
    %v260 = vld [vmem:[%s3 + $0x80] sm:$0xff]
    %v261 = vld [vmem:[%s3 + $0x88] sm:$0xff]
    %v262 = vld [vmem:[%s3 + $0x90] sm:$0xff]
    %v263 = vld [vmem:[%s3 + $0x98] sm:$0xff]
    %v264 = vld [vmem:[%s3 + $0xa0] sm:$0xff]
    %v265 = vld [vmem:[%s3 + $0xa8] sm:$0xff]
    %v266 = vld [vmem:[%s3 + $0xb0] sm:$0xff]
    %v267 = vld [vmem:[%s3 + $0xb8] sm:$0xff]
    %v268 = vld [vmem:[%s3 + $0xc0] sm:$0xff]
    %v269 = vld [vmem:[%s3 + $0xc8] sm:$0xff]
    %v270 = vld [vmem:[%s3 + $0xd0] sm:$0xff]
    %v271 = vld [vmem:[%s3 + $0xd8] sm:$0xff]
    %v272 = vld [vmem:[%s3 + $0xe0] sm:$0xff]
    %v273 = vld [vmem:[%s3 + $0xe8] sm:$0xff]
    %v274 = vld [vmem:[%s3 + $0xf0] sm:$0xff]
    %v275 = vld [vmem:[%s3 + $0xf8] sm:$0xff]
    %v276 = vld [vmem:[%s3 + $0x100] sm:$0xff]
    %v277 = vld [vmem:[%s3 + $0x108] sm:$0xff]
    %v278 = vld [vmem:[%s3 + $0x110] sm:$0xff]
    %v279 = vld [vmem:[%s3 + $0x118] sm:$0xff]
    %v280 = vld [vmem:[%s3 + $0x120] sm:$0xff]
    %v281 = vld [vmem:[%s3 + $0x128] sm:$0xff]
    %v282 = vld [vmem:[%s3 + $0x130] sm:$0xff]
    %v283 = vld [vmem:[%s3 + $0x138] sm:$0xff]
    %v284 = vld [vmem:[%s3 + $0x140] sm:$0xff]
    %v285 = vld [vmem:[%s3 + $0x148] sm:$0xff]
    %v286 = vld [vmem:[%s3 + $0x150] sm:$0xff]
    %v287 = vld [vmem:[%s3 + $0x158] sm:$0xff]
    %v288 = vld [vmem:[%s3 + $0x160] sm:$0xff]
    %v289 = vld [vmem:[%s3 + $0x168] sm:$0xff]
    %v290 = vld [vmem:[%s3 + $0x170] sm:$0xff]
    %v291 = vld [vmem:[%s3 + $0x178] sm:$0xff]
    %v292 = vld [vmem:[%s3 + $0x180] sm:$0xff]
    %v293 = vld [vmem:[%s3 + $0x188] sm:$0xff]
    %v294 = vld [vmem:[%s3 + $0x190] sm:$0xff]
    %v295 = vld [vmem:[%s3 + $0x198] sm:$0xff]
    %v296 = vld [vmem:[%s3 + $0x1a0] sm:$0xff]
    %v297 = vld [vmem:[%s3 + $0x1a8] sm:$0xff]
    %v298 = vld [vmem:[%s3 + $0x1b0] sm:$0xff]
    %v299 = vld [vmem:[%s3 + $0x1b8] sm:$0xff]
    %v300 = vld [vmem:[%s3 + $0x1c0] sm:$0xff]
    %v301 = vld [vmem:[%s3 + $0x1c8] sm:$0xff]
    %v302 = vld [vmem:[%s3 + $0x1d0] sm:$0xff]
    %v303 = vld [vmem:[%s3 + $0x1d8] sm:$0xff]
    %v304 = vld [vmem:[%s3 + $0x1e0] sm:$0xff]
    %v305 = vld [vmem:[%s3 + $0x1e8] sm:$0xff]
    %v306 = vld [vmem:[%s3 + $0x1f0] sm:$0xff]
    %v307 = vld [vmem:[%s3 + $0x1f8] sm:$0xff]
    %v308 = vld [vmem:[%s3 + $0x200] sm:$0xff]
    %v309 = vld [vmem:[%s3 + $0x208] sm:$0xff]
    %v310 = vld [vmem:[%s3 + $0x210] sm:$0xff]
    %v311 = vld [vmem:[%s3 + $0x218] sm:$0xff]
    %v312 = vld [vmem:[%s3 + $0x220] sm:$0xff]
    %v313 = vld [vmem:[%s3 + $0x228] sm:$0xff]
    %v314 = vld [vmem:[%s3 + $0x230] sm:$0xff]
    %v315 = vld [vmem:[%s3 + $0x238] sm:$0xff]
    %v316 = vld [vmem:[%s3 + $0x240] sm:$0xff]
    %v317 = vld [vmem:[%s3 + $0x248] sm:$0xff]
    %v318 = vld [vmem:[%s3 + $0x250] sm:$0xff]
    %v319 = vld [vmem:[%s3 + $0x258] sm:$0xff]
    %v320 = vld [vmem:[%s3 + $0x260] sm:$0xff]
    %v321 = vld [vmem:[%s3 + $0x268] sm:$0xff]
    %v322 = vld [vmem:[%s3 + $0x270] sm:$0xff]
    %v323 = vld [vmem:[%s3 + $0x278] sm:$0xff]
    %v324 = vpack.c.bf16 %v236, %v236
    %v325 = vpack.c.bf16 %v237, %v237
    %v326 = vpack.c.bf16 %v238, %v238
    %v327 = vpack.c.bf16 %v239, %v239
    %v328 = vpack.c.bf16 %v240, %v240
    %v329 = vld [vmem:[%s5] sm:$0xff]
    %v330 = vld [vmem:[%s5 + $0x8] sm:$0xff]
    %v331 = vld [vmem:[%s5 + $0x10] sm:$0xff]
    %v332 = vld [vmem:[%s5 + $0x18] sm:$0xff]
    %v333 = vld [vmem:[%s5 + $0x20] sm:$0xff]
    %v334 = vld [vmem:[%s5 + $0x28] sm:$0xff]
    %v335 = vld [vmem:[%s5 + $0x30] sm:$0xff]
    %v336 = vld [vmem:[%s5 + $0x38] sm:$0xff]
    %v337 = vld [vmem:[%s5 + $0x40] sm:$0xff]
    %v338 = vld [vmem:[%s5 + $0x48] sm:$0xff]
    %v339 = vld [vmem:[%s5 + $0x50] sm:$0xff]
    %v340 = vld [vmem:[%s5 + $0x58] sm:$0xff]
    %v341 = vld [vmem:[%s5 + $0x60] sm:$0xff]
    %v342 = vld [vmem:[%s5 + $0x68] sm:$0xff]
    %v343 = vld [vmem:[%s5 + $0x70] sm:$0xff]
    %v344 = vld [vmem:[%s5 + $0x78] sm:$0xff]
    %v345 = vld [vmem:[%s5 + $0x80] sm:$0xff]
    %v346 = vld [vmem:[%s5 + $0x88] sm:$0xff]
    %v347 = vld [vmem:[%s5 + $0x90] sm:$0xff]
    %v348 = vld [vmem:[%s5 + $0x98] sm:$0xff]
    %v349 = vld [vmem:[%s5 + $0xa0] sm:$0xff]
    %v350 = vld [vmem:[%s5 + $0xa8] sm:$0xff]
    %v351 = vld [vmem:[%s5 + $0xb0] sm:$0xff]
    %v352 = vld [vmem:[%s5 + $0xb8] sm:$0xff]
    %v353 = vld [vmem:[%s5 + $0xc0] sm:$0xff]
    %v354 = vld [vmem:[%s5 + $0xc8] sm:$0xff]
    %v355 = vld [vmem:[%s5 + $0xd0] sm:$0xff]
    %v356 = vld [vmem:[%s5 + $0xd8] sm:$0xff]
    %v357 = vld [vmem:[%s5 + $0xe0] sm:$0xff]
    %v358 = vld [vmem:[%s5 + $0xe8] sm:$0xff]
    %v359 = vld [vmem:[%s5 + $0xf0] sm:$0xff]
    %v360 = vld [vmem:[%s5 + $0xf8] sm:$0xff]
    %v361 = vld [vmem:[%s5 + $0x100] sm:$0xff]
    %v362 = vld [vmem:[%s5 + $0x108] sm:$0xff]
    %v363 = vld [vmem:[%s5 + $0x110] sm:$0xff]
    %v364 = vld [vmem:[%s5 + $0x118] sm:$0xff]
    %v365 = vld [vmem:[%s5 + $0x120] sm:$0xff]
    %v366 = vld [vmem:[%s5 + $0x128] sm:$0xff]
    %v367 = vld [vmem:[%s5 + $0x130] sm:$0xff]
    %v368 = vld [vmem:[%s5 + $0x138] sm:$0xff]
    %v369 = vld [vmem:[%s5 + $0x140] sm:$0xff]
    %v370 = vld [vmem:[%s5 + $0x148] sm:$0xff]
    %v371 = vld [vmem:[%s5 + $0x150] sm:$0xff]
    %v372 = vld [vmem:[%s5 + $0x158] sm:$0xff]
    %v373 = vld [vmem:[%s5 + $0x160] sm:$0xff]
    %v374 = vld [vmem:[%s5 + $0x168] sm:$0xff]
    %v375 = vld [vmem:[%s5 + $0x170] sm:$0xff]
    %v376 = vld [vmem:[%s5 + $0x178] sm:$0xff]
    %v377 = vld [vmem:[%s5 + $0x180] sm:$0xff]
    %v378 = vld [vmem:[%s5 + $0x188] sm:$0xff]
    %v379 = vld [vmem:[%s5 + $0x190] sm:$0xff]
    %v380 = vld [vmem:[%s5 + $0x198] sm:$0xff]
    %v381 = vld [vmem:[%s5 + $0x1a0] sm:$0xff]
    %v382 = vld [vmem:[%s5 + $0x1a8] sm:$0xff]
    %v383 = vld [vmem:[%s5 + $0x1b0] sm:$0xff]
    %v384 = vld [vmem:[%s5 + $0x1b8] sm:$0xff]
    %v385 = vld [vmem:[%s5 + $0x1c0] sm:$0xff]
    %v386 = vld [vmem:[%s5 + $0x1c8] sm:$0xff]
    %v387 = vld [vmem:[%s5 + $0x1d0] sm:$0xff]
    %v388 = vld [vmem:[%s5 + $0x1d8] sm:$0xff]
    %v389 = vld [vmem:[%s5 + $0x1e0] sm:$0xff]
    %v390 = vld [vmem:[%s5 + $0x1e8] sm:$0xff]
    %v391 = vld [vmem:[%s5 + $0x1f0] sm:$0xff]
    %v392 = vld [vmem:[%s5 + $0x1f8] sm:$0xff]
    %v393 = vld [vmem:[%s5 + $0x200] sm:$0xff]
    %v394 = vld [vmem:[%s5 + $0x208] sm:$0xff]
    %v395 = vld [vmem:[%s5 + $0x210] sm:$0xff]
    %v396 = vld [vmem:[%s5 + $0x218] sm:$0xff]
    %v397 = vld [vmem:[%s5 + $0x220] sm:$0xff]
    %v398 = vld [vmem:[%s5 + $0x228] sm:$0xff]
    %v399 = vld [vmem:[%s5 + $0x230] sm:$0xff]
    %v400 = vld [vmem:[%s5 + $0x238] sm:$0xff]
    %v401 = vld [vmem:[%s5 + $0x240] sm:$0xff]
    %v402 = vld [vmem:[%s5 + $0x248] sm:$0xff]
    %v403 = vld [vmem:[%s5 + $0x250] sm:$0xff]
    %v404 = vld [vmem:[%s5 + $0x258] sm:$0xff]
    %v405 = vld [vmem:[%s5 + $0x260] sm:$0xff]
    %v406 = vld [vmem:[%s5 + $0x268] sm:$0xff]
    %v407 = vld [vmem:[%s5 + $0x270] sm:$0xff]
    %v408 = vld [vmem:[%s5 + $0x278] sm:$0xff]
    %v489 = vunpack.c.l.b16 %v329
    %v490 = vunpack.c.h.b16 %v329
    %v491 = vunpack.c.l.b16 %v330
    %v492 = vunpack.c.h.b16 %v330
    %v493 = vunpack.c.l.b16 %v331
    %v494 = vunpack.c.h.b16 %v331
    %v495 = vunpack.c.l.b16 %v332
    %v496 = vunpack.c.h.b16 %v332
    %v497 = vunpack.c.l.b16 %v333
    %v498 = vunpack.c.h.b16 %v333
    %v499 = vunpack.c.l.b16 %v334
    %v500 = vunpack.c.h.b16 %v334
    %v501 = vunpack.c.l.b16 %v335
    %v502 = vunpack.c.h.b16 %v335
    %v503 = vunpack.c.l.b16 %v336
    %v504 = vunpack.c.h.b16 %v336
    %v505 = vunpack.c.l.b16 %v337
    %v506 = vunpack.c.h.b16 %v337
    %v507 = vunpack.c.l.b16 %v338
    %v508 = vunpack.c.h.b16 %v338
    %v509 = vunpack.c.l.b16 %v339
    %v510 = vunpack.c.h.b16 %v339
    %v511 = vunpack.c.l.b16 %v340
    %v512 = vunpack.c.h.b16 %v340
    %v513 = vunpack.c.l.b16 %v341
    %v514 = vunpack.c.h.b16 %v341
    %v515 = vunpack.c.l.b16 %v342
    %v516 = vunpack.c.h.b16 %v342
    %v517 = vunpack.c.l.b16 %v343
    %v518 = vunpack.c.h.b16 %v343
    %v519 = vunpack.c.l.b16 %v344
    %v520 = vunpack.c.h.b16 %v344
    %v521 = vunpack.c.l.b16 %v345
    %v522 = vunpack.c.h.b16 %v345
    %v523 = vunpack.c.l.b16 %v346
    %v524 = vunpack.c.h.b16 %v346
    %v525 = vunpack.c.l.b16 %v347
    %v526 = vunpack.c.h.b16 %v347
    %v527 = vunpack.c.l.b16 %v348
    %v528 = vunpack.c.h.b16 %v348
    %v529 = vunpack.c.l.b16 %v349
    %v530 = vunpack.c.h.b16 %v349
    %v531 = vunpack.c.l.b16 %v350
    %v532 = vunpack.c.h.b16 %v350
    %v533 = vunpack.c.l.b16 %v351
    %v534 = vunpack.c.h.b16 %v351
    %v535 = vunpack.c.l.b16 %v352
    %v536 = vunpack.c.h.b16 %v352
    %v537 = vunpack.c.l.b16 %v353
    %v538 = vunpack.c.h.b16 %v353
    %v539 = vunpack.c.l.b16 %v354
    %v540 = vunpack.c.h.b16 %v354
    %v541 = vunpack.c.l.b16 %v355
    %v542 = vunpack.c.h.b16 %v355
    %v543 = vunpack.c.l.b16 %v356
    %v544 = vunpack.c.h.b16 %v356
    %v545 = vunpack.c.l.b16 %v357
    %v546 = vunpack.c.h.b16 %v357
    %v547 = vunpack.c.l.b16 %v358
    %v548 = vunpack.c.h.b16 %v358
    %v549 = vunpack.c.l.b16 %v359
    %v550 = vunpack.c.h.b16 %v359
    %v551 = vunpack.c.l.b16 %v360
    %v552 = vunpack.c.h.b16 %v360
    %v553 = vunpack.c.l.b16 %v361
    %v554 = vunpack.c.h.b16 %v361
    %v555 = vunpack.c.l.b16 %v362
    %v556 = vunpack.c.h.b16 %v362
    %v557 = vunpack.c.l.b16 %v363
    %v558 = vunpack.c.h.b16 %v363
    %v559 = vunpack.c.l.b16 %v364
    %v560 = vunpack.c.h.b16 %v364
    %v561 = vunpack.c.l.b16 %v365
    %v562 = vunpack.c.h.b16 %v365
    %v563 = vunpack.c.l.b16 %v366
    %v564 = vunpack.c.h.b16 %v366
    %v565 = vunpack.c.l.b16 %v367
    %v566 = vunpack.c.h.b16 %v367
    %v567 = vunpack.c.l.b16 %v368
    %v568 = vunpack.c.h.b16 %v368
    %v569 = vunpack.c.l.b16 %v369
    %v570 = vunpack.c.h.b16 %v369
    %v571 = vunpack.c.l.b16 %v370
    %v572 = vunpack.c.h.b16 %v370
    %v573 = vunpack.c.l.b16 %v371
    %v574 = vunpack.c.h.b16 %v371
    %v575 = vunpack.c.l.b16 %v372
    %v576 = vunpack.c.h.b16 %v372
    %v577 = vunpack.c.l.b16 %v373
    %v578 = vunpack.c.h.b16 %v373
    %v579 = vunpack.c.l.b16 %v374
    %v580 = vunpack.c.h.b16 %v374
    %v581 = vunpack.c.l.b16 %v375
    %v582 = vunpack.c.h.b16 %v375
    %v583 = vunpack.c.l.b16 %v376
    %v584 = vunpack.c.h.b16 %v376
    %v585 = vunpack.c.l.b16 %v377
    %v586 = vunpack.c.h.b16 %v377
    %v587 = vunpack.c.l.b16 %v378
    %v588 = vunpack.c.h.b16 %v378
    %v589 = vunpack.c.l.b16 %v379
    %v590 = vunpack.c.h.b16 %v379
    %v591 = vunpack.c.l.b16 %v380
    %v592 = vunpack.c.h.b16 %v380
    %v593 = vunpack.c.l.b16 %v381
    %v594 = vunpack.c.h.b16 %v381
    %v595 = vunpack.c.l.b16 %v382
    %v596 = vunpack.c.h.b16 %v382
    %v597 = vunpack.c.l.b16 %v383
    %v598 = vunpack.c.h.b16 %v383
    %v599 = vunpack.c.l.b16 %v384
    %v600 = vunpack.c.h.b16 %v384
    %v601 = vunpack.c.l.b16 %v385
    %v602 = vunpack.c.h.b16 %v385
    %v603 = vunpack.c.l.b16 %v386
    %v604 = vunpack.c.h.b16 %v386
    %v605 = vunpack.c.l.b16 %v387
    %v606 = vunpack.c.h.b16 %v387
    %v607 = vunpack.c.l.b16 %v388
    %v608 = vunpack.c.h.b16 %v388
    %v609 = vunpack.c.l.b16 %v389
    %v610 = vunpack.c.h.b16 %v389
    %v611 = vunpack.c.l.b16 %v390
    %v612 = vunpack.c.h.b16 %v390
    %v613 = vunpack.c.l.b16 %v391
    %v614 = vunpack.c.h.b16 %v391
    %v615 = vunpack.c.l.b16 %v392
    %v616 = vunpack.c.h.b16 %v392
    %v617 = vunpack.c.l.b16 %v393
    %v618 = vunpack.c.h.b16 %v393
    %v619 = vunpack.c.l.b16 %v394
    %v620 = vunpack.c.h.b16 %v394
    %v621 = vunpack.c.l.b16 %v395
    %v622 = vunpack.c.h.b16 %v395
    %v623 = vunpack.c.l.b16 %v396
    %v624 = vunpack.c.h.b16 %v396
    %v625 = vunpack.c.l.b16 %v397
    %v626 = vunpack.c.h.b16 %v397
    %v627 = vunpack.c.l.b16 %v398
    %v628 = vunpack.c.h.b16 %v398
    %v629 = vunpack.c.l.b16 %v399
    %v630 = vunpack.c.h.b16 %v399
    %v631 = vunpack.c.l.b16 %v400
    %v632 = vunpack.c.h.b16 %v400
    %v633 = vunpack.c.l.b16 %v401
    %v634 = vunpack.c.h.b16 %v401
    %v635 = vunpack.c.l.b16 %v402
    %v636 = vunpack.c.h.b16 %v402
    %v637 = vunpack.c.l.b16 %v403
    %v638 = vunpack.c.h.b16 %v403
    %v639 = vunpack.c.l.b16 %v404
    %v640 = vunpack.c.h.b16 %v404
    %v641 = vunpack.c.l.b16 %v405
    %v642 = vunpack.c.h.b16 %v405
    %v643 = vunpack.c.l.b16 %v406
    %v644 = vunpack.c.h.b16 %v406
    %v645 = vunpack.c.l.b16 %v407
    %v646 = vunpack.c.h.b16 %v407
    %v647 = vunpack.c.l.b16 %v408
    %v648 = vunpack.c.h.b16 %v408
    %v649 = vpack.c.b16 %v491, %v489
    %v650 = vpack.c.b16 %v492, %v490
    %v651 = vpack.c.b16 %v495, %v493
    %v652 = vpack.c.b16 %v496, %v494
    %v653 = vpack.c.b16 %v499, %v497
    %v654 = vpack.c.b16 %v500, %v498
    %v655 = vpack.c.b16 %v503, %v501
    %v656 = vpack.c.b16 %v504, %v502
    %v657 = vpack.c.b16 %v507, %v505
    %v658 = vpack.c.b16 %v508, %v506
    %v659 = vpack.c.b16 %v511, %v509
    %v660 = vpack.c.b16 %v512, %v510
    %v661 = vpack.c.b16 %v515, %v513
    %v662 = vpack.c.b16 %v516, %v514
    %v663 = vpack.c.b16 %v519, %v517
    %v664 = vpack.c.b16 %v520, %v518
    %v665 = vpack.c.b16 %v523, %v521
    %v666 = vpack.c.b16 %v524, %v522
    %v667 = vpack.c.b16 %v527, %v525
    %v668 = vpack.c.b16 %v528, %v526
    %v669 = vpack.c.b16 %v531, %v529
    %v670 = vpack.c.b16 %v532, %v530
    %v671 = vpack.c.b16 %v535, %v533
    %v672 = vpack.c.b16 %v536, %v534
    %v673 = vpack.c.b16 %v539, %v537
    %v674 = vpack.c.b16 %v540, %v538
    %v675 = vpack.c.b16 %v543, %v541
    %v676 = vpack.c.b16 %v544, %v542
    %v677 = vpack.c.b16 %v547, %v545
    %v678 = vpack.c.b16 %v548, %v546
    %v679 = vpack.c.b16 %v551, %v549
    %v680 = vpack.c.b16 %v552, %v550
    %v681 = vpack.c.b16 %v555, %v553
    %v682 = vpack.c.b16 %v556, %v554
    %v683 = vpack.c.b16 %v559, %v557
    %v684 = vpack.c.b16 %v560, %v558
    %v685 = vpack.c.b16 %v563, %v561
    %v686 = vpack.c.b16 %v564, %v562
    %v687 = vpack.c.b16 %v567, %v565
    %v688 = vpack.c.b16 %v568, %v566
    %v689 = vpack.c.b16 %v571, %v569
    %v690 = vpack.c.b16 %v572, %v570
    %v691 = vpack.c.b16 %v575, %v573
    %v692 = vpack.c.b16 %v576, %v574
    %v693 = vpack.c.b16 %v579, %v577
    %v694 = vpack.c.b16 %v580, %v578
    %v695 = vpack.c.b16 %v583, %v581
    %v696 = vpack.c.b16 %v584, %v582
    %v697 = vpack.c.b16 %v587, %v585
    %v698 = vpack.c.b16 %v588, %v586
    %v699 = vpack.c.b16 %v591, %v589
    %v700 = vpack.c.b16 %v592, %v590
    %v701 = vpack.c.b16 %v595, %v593
    %v702 = vpack.c.b16 %v596, %v594
    %v703 = vpack.c.b16 %v599, %v597
    %v704 = vpack.c.b16 %v600, %v598
    %v705 = vpack.c.b16 %v603, %v601
    %v706 = vpack.c.b16 %v604, %v602
    %v707 = vpack.c.b16 %v607, %v605
    %v708 = vpack.c.b16 %v608, %v606
    %v709 = vpack.c.b16 %v611, %v609
    %v710 = vpack.c.b16 %v612, %v610
    %v711 = vpack.c.b16 %v615, %v613
    %v712 = vpack.c.b16 %v616, %v614
    %v713 = vpack.c.b16 %v619, %v617
    %v714 = vpack.c.b16 %v620, %v618
    %v715 = vpack.c.b16 %v623, %v621
    %v716 = vpack.c.b16 %v624, %v622
    %v717 = vpack.c.b16 %v627, %v625
    %v718 = vpack.c.b16 %v628, %v626
    %v719 = vpack.c.b16 %v631, %v629
    %v720 = vpack.c.b16 %v632, %v630
    %v721 = vpack.c.b16 %v635, %v633
    %v722 = vpack.c.b16 %v636, %v634
    %v723 = vpack.c.b16 %v639, %v637
    %v724 = vpack.c.b16 %v640, %v638
    %v725 = vpack.c.b16 %v643, %v641
    %v726 = vpack.c.b16 %v644, %v642
    %v727 = vpack.c.b16 %v647, %v645
    %v728 = vpack.c.b16 %v648, %v646
    %809 = vmatpush.bf16.msra.mxu0 %v663
    %810 = vmatpush.bf16.msra.mxu0 %v661
    %811 = vmatpush.bf16.msra.mxu0 %v659
    %812 = vmatpush.bf16.msra.mxu0 %v657
    %813 = vmatpush.bf16.msra.mxu0 %v655
    %814 = vmatpush.bf16.msra.mxu0 %v653
    %815 = vmatpush.bf16.msra.mxu0 %v651
    %816 = vmatpush.bf16.msra.mxu0 %v649
    %817 = vmatmul.bf16.gmra.mxu0 %v324
    %v818 = vpop.f32.mrf.mxu0
    %v819 = vadd.f32 0.0, %v818
    %v820 = vpop.f32.mrf.mxu0
    %821 = vdwg.mxu0
    %822 = vmatpush.bf16.msra.mxu0 %v679
    %823 = vmatpush.bf16.msra.mxu0 %v677
    %824 = vmatpush.bf16.msra.mxu0 %v675
    %825 = vmatpush.bf16.msra.mxu0 %v673
    %826 = vmatpush.bf16.msra.mxu0 %v671
    %827 = vmatpush.bf16.msra.mxu0 %v669
    %828 = vmatpush.bf16.msra.mxu0 %v667
    %829 = vmatpush.bf16.msra.mxu0 %v665
    %830 = vmatmul.bf16.gmra.mxu0 %v325
    %v831 = vpop.f32.mrf.mxu0
    %v832 = vadd.f32 %v819, %v831
    %v833 = vpop.f32.mrf.mxu0
    %834 = vdwg.mxu0
    %835 = vmatpush.bf16.msra.mxu0 %v695
    %836 = vmatpush.bf16.msra.mxu0 %v693
    %837 = vmatpush.bf16.msra.mxu0 %v691
    %838 = vmatpush.bf16.msra.mxu0 %v689
    %839 = vmatpush.bf16.msra.mxu0 %v687
    %840 = vmatpush.bf16.msra.mxu0 %v685
    %841 = vmatpush.bf16.msra.mxu0 %v683
    %842 = vmatpush.bf16.msra.mxu0 %v681
    %843 = vmatmul.bf16.gmra.mxu0 %v326
    %v844 = vpop.f32.mrf.mxu0
    %v845 = vadd.f32 %v832, %v844
    %v846 = vpop.f32.mrf.mxu0
    %847 = vdwg.mxu0
    %848 = vmatpush.bf16.msra.mxu0 %v711
    %849 = vmatpush.bf16.msra.mxu0 %v709
    %850 = vmatpush.bf16.msra.mxu0 %v707
    %851 = vmatpush.bf16.msra.mxu0 %v705
    %852 = vmatpush.bf16.msra.mxu0 %v703
    %853 = vmatpush.bf16.msra.mxu0 %v701
    %854 = vmatpush.bf16.msra.mxu0 %v699
    %855 = vmatpush.bf16.msra.mxu0 %v697
    %856 = vmatmul.bf16.gmra.mxu0 %v327
    %v857 = vpop.f32.mrf.mxu0
    %v858 = vadd.f32 %v845, %v857
    %v859 = vpop.f32.mrf.mxu0
    %860 = vdwg.mxu0
    %861 = vmatpush.bf16.msra.mxu0 %v727
    %862 = vmatpush.bf16.msra.mxu0 %v725
    %863 = vmatpush.bf16.msra.mxu0 %v723
    %864 = vmatpush.bf16.msra.mxu0 %v721
    %865 = vmatpush.bf16.msra.mxu0 %v719
    %866 = vmatpush.bf16.msra.mxu0 %v717
    %867 = vmatpush.bf16.msra.mxu0 %v715
    %868 = vmatpush.bf16.msra.mxu0 %v713
    %869 = vmatmul.bf16.gmra.mxu0 %v328
    %v870 = vpop.f32.mrf.mxu0
    %v871 = vadd.f32 %v858, %v870
    %v872 = vpop.f32.mrf.mxu0
    %873 = vdwg.mxu0
    %874 = vmatpush.bf16.msra.mxu0 %v664
    %875 = vmatpush.bf16.msra.mxu0 %v662
    %876 = vmatpush.bf16.msra.mxu0 %v660
    %877 = vmatpush.bf16.msra.mxu0 %v658
    %878 = vmatpush.bf16.msra.mxu0 %v656
    %879 = vmatpush.bf16.msra.mxu0 %v654
    %880 = vmatpush.bf16.msra.mxu0 %v652
    %881 = vmatpush.bf16.msra.mxu0 %v650
    %882 = vmatmul.bf16.gmra.mxu0 %v324
    %v883 = vpop.f32.mrf.mxu0
    %v884 = vadd.f32 0.0, %v883
    %v885 = vpop.f32.mrf.mxu0
    %886 = vdwg.mxu0
    %887 = vmatpush.bf16.msra.mxu0 %v680
    %888 = vmatpush.bf16.msra.mxu0 %v678
    %889 = vmatpush.bf16.msra.mxu0 %v676
    %890 = vmatpush.bf16.msra.mxu0 %v674
    %891 = vmatpush.bf16.msra.mxu0 %v672
    %892 = vmatpush.bf16.msra.mxu0 %v670
    %893 = vmatpush.bf16.msra.mxu0 %v668
    %894 = vmatpush.bf16.msra.mxu0 %v666
    %895 = vmatmul.bf16.gmra.mxu0 %v325
    %v896 = vpop.f32.mrf.mxu0
    %v897 = vadd.f32 %v884, %v896
    %v898 = vpop.f32.mrf.mxu0
    %899 = vdwg.mxu0
    %900 = vmatpush.bf16.msra.mxu0 %v696
    %901 = vmatpush.bf16.msra.mxu0 %v694
    %902 = vmatpush.bf16.msra.mxu0 %v692
    %903 = vmatpush.bf16.msra.mxu0 %v690
    %904 = vmatpush.bf16.msra.mxu0 %v688
    %905 = vmatpush.bf16.msra.mxu0 %v686
    %906 = vmatpush.bf16.msra.mxu0 %v684
    %907 = vmatpush.bf16.msra.mxu0 %v682
    %908 = vmatmul.bf16.gmra.mxu0 %v326
    %v909 = vpop.f32.mrf.mxu0
    %v910 = vadd.f32 %v897, %v909
    %v911 = vpop.f32.mrf.mxu0
    %912 = vdwg.mxu0
    %913 = vmatpush.bf16.msra.mxu0 %v712
    %914 = vmatpush.bf16.msra.mxu0 %v710
    %915 = vmatpush.bf16.msra.mxu0 %v708
    %916 = vmatpush.bf16.msra.mxu0 %v706
    %917 = vmatpush.bf16.msra.mxu0 %v704
    %918 = vmatpush.bf16.msra.mxu0 %v702
    %919 = vmatpush.bf16.msra.mxu0 %v700
    %920 = vmatpush.bf16.msra.mxu0 %v698
    %921 = vmatmul.bf16.gmra.mxu0 %v327
    %v922 = vpop.f32.mrf.mxu0
    %v923 = vadd.f32 %v910, %v922
    %v924 = vpop.f32.mrf.mxu0
    %925 = vdwg.mxu0
    %926 = vmatpush.bf16.msra.mxu0 %v728
    %927 = vmatpush.bf16.msra.mxu0 %v726
    %928 = vmatpush.bf16.msra.mxu0 %v724
    %929 = vmatpush.bf16.msra.mxu0 %v722
    %930 = vmatpush.bf16.msra.mxu0 %v720
    %931 = vmatpush.bf16.msra.mxu0 %v718
    %932 = vmatpush.bf16.msra.mxu0 %v716
    %933 = vmatpush.bf16.msra.mxu0 %v714
    %934 = vmatmul.bf16.gmra.mxu0 %v328
    %v935 = vpop.f32.mrf.mxu0
    %v936 = vadd.f32 %v923, %v935
    %v937 = vpop.f32.mrf.mxu0
    %938 = vdwg.mxu0
    %v942 = vunpack.c.l.b16 %v241
    %v943 = vunpack.c.h.b16 %v241
    %v944 = vunpack.c.l.b16 %v242
    %v945 = vunpack.c.h.b16 %v242
    %v946 = vunpack.c.l.b16 %v243
    %v947 = vpack.c.b16 %v942, %v942
    %v948 = vpack.c.b16 %v943, %v943
    %v949 = vpack.c.b16 %v944, %v944
    %v950 = vpack.c.b16 %v945, %v945
    %v951 = vpack.c.b16 %v946, %v946
    %v1037 = vunpack.c.l.b16 %v244
    %v1038 = vunpack.c.h.b16 %v244
    %v1039 = vunpack.c.l.b16 %v245
    %v1040 = vunpack.c.h.b16 %v245
    %v1041 = vunpack.c.l.b16 %v246
    %v1042 = vunpack.c.h.b16 %v246
    %v1043 = vunpack.c.l.b16 %v247
    %v1044 = vunpack.c.h.b16 %v247
    %v1045 = vunpack.c.l.b16 %v248
    %v1046 = vunpack.c.h.b16 %v248
    %v1047 = vunpack.c.l.b16 %v249
    %v1048 = vunpack.c.h.b16 %v249
    %v1049 = vunpack.c.l.b16 %v250
    %v1050 = vunpack.c.h.b16 %v250
    %v1051 = vunpack.c.l.b16 %v251
    %v1052 = vunpack.c.h.b16 %v251
    %v1053 = vunpack.c.l.b16 %v252
    %v1054 = vunpack.c.h.b16 %v252
    %v1055 = vunpack.c.l.b16 %v253
    %v1056 = vunpack.c.h.b16 %v253
    %v1057 = vunpack.c.l.b16 %v254
    %v1058 = vunpack.c.h.b16 %v254
    %v1059 = vunpack.c.l.b16 %v255
    %v1060 = vunpack.c.h.b16 %v255
    %v1061 = vunpack.c.l.b16 %v256
    %v1062 = vunpack.c.h.b16 %v256
    %v1063 = vunpack.c.l.b16 %v257
    %v1064 = vunpack.c.h.b16 %v257
    %v1065 = vunpack.c.l.b16 %v258
    %v1066 = vunpack.c.h.b16 %v258
    %v1067 = vunpack.c.l.b16 %v259
    %v1068 = vunpack.c.h.b16 %v259
    %v1069 = vunpack.c.l.b16 %v260
    %v1070 = vunpack.c.h.b16 %v260
    %v1071 = vunpack.c.l.b16 %v261
    %v1072 = vunpack.c.h.b16 %v261
    %v1073 = vunpack.c.l.b16 %v262
    %v1074 = vunpack.c.h.b16 %v262
    %v1075 = vunpack.c.l.b16 %v263
    %v1076 = vunpack.c.h.b16 %v263
    %v1077 = vunpack.c.l.b16 %v264
    %v1078 = vunpack.c.h.b16 %v264
    %v1079 = vunpack.c.l.b16 %v265
    %v1080 = vunpack.c.h.b16 %v265
    %v1081 = vunpack.c.l.b16 %v266
    %v1082 = vunpack.c.h.b16 %v266
    %v1083 = vunpack.c.l.b16 %v267
    %v1084 = vunpack.c.h.b16 %v267
    %v1085 = vunpack.c.l.b16 %v268
    %v1086 = vunpack.c.h.b16 %v268
    %v1087 = vunpack.c.l.b16 %v269
    %v1088 = vunpack.c.h.b16 %v269
    %v1089 = vunpack.c.l.b16 %v270
    %v1090 = vunpack.c.h.b16 %v270
    %v1091 = vunpack.c.l.b16 %v271
    %v1092 = vunpack.c.h.b16 %v271
    %v1093 = vunpack.c.l.b16 %v272
    %v1094 = vunpack.c.h.b16 %v272
    %v1095 = vunpack.c.l.b16 %v273
    %v1096 = vunpack.c.h.b16 %v273
    %v1097 = vunpack.c.l.b16 %v274
    %v1098 = vunpack.c.h.b16 %v274
    %v1099 = vunpack.c.l.b16 %v275
    %v1100 = vunpack.c.h.b16 %v275
    %v1101 = vunpack.c.l.b16 %v276
    %v1102 = vunpack.c.h.b16 %v276
    %v1103 = vunpack.c.l.b16 %v277
    %v1104 = vunpack.c.h.b16 %v277
    %v1105 = vunpack.c.l.b16 %v278
    %v1106 = vunpack.c.h.b16 %v278
    %v1107 = vunpack.c.l.b16 %v279
    %v1108 = vunpack.c.h.b16 %v279
    %v1109 = vunpack.c.l.b16 %v280
    %v1110 = vunpack.c.h.b16 %v280
    %v1111 = vunpack.c.l.b16 %v281
    %v1112 = vunpack.c.h.b16 %v281
    %v1113 = vunpack.c.l.b16 %v282
    %v1114 = vunpack.c.h.b16 %v282
    %v1115 = vunpack.c.l.b16 %v283
    %v1116 = vunpack.c.h.b16 %v283
    %v1117 = vunpack.c.l.b16 %v284
    %v1118 = vunpack.c.h.b16 %v284
    %v1119 = vunpack.c.l.b16 %v285
    %v1120 = vunpack.c.h.b16 %v285
    %v1121 = vunpack.c.l.b16 %v286
    %v1122 = vunpack.c.h.b16 %v286
    %v1123 = vunpack.c.l.b16 %v287
    %v1124 = vunpack.c.h.b16 %v287
    %v1125 = vunpack.c.l.b16 %v288
    %v1126 = vunpack.c.h.b16 %v288
    %v1127 = vunpack.c.l.b16 %v289
    %v1128 = vunpack.c.h.b16 %v289
    %v1129 = vunpack.c.l.b16 %v290
    %v1130 = vunpack.c.h.b16 %v290
    %v1131 = vunpack.c.l.b16 %v291
    %v1132 = vunpack.c.h.b16 %v291
    %v1133 = vunpack.c.l.b16 %v292
    %v1134 = vunpack.c.h.b16 %v292
    %v1135 = vunpack.c.l.b16 %v293
    %v1136 = vunpack.c.h.b16 %v293
    %v1137 = vunpack.c.l.b16 %v294
    %v1138 = vunpack.c.h.b16 %v294
    %v1139 = vunpack.c.l.b16 %v295
    %v1140 = vunpack.c.h.b16 %v295
    %v1141 = vunpack.c.l.b16 %v296
    %v1142 = vunpack.c.h.b16 %v296
    %v1143 = vunpack.c.l.b16 %v297
    %v1144 = vunpack.c.h.b16 %v297
    %v1145 = vunpack.c.l.b16 %v298
    %v1146 = vunpack.c.h.b16 %v298
    %v1147 = vunpack.c.l.b16 %v299
    %v1148 = vunpack.c.h.b16 %v299
    %v1149 = vunpack.c.l.b16 %v300
    %v1150 = vunpack.c.h.b16 %v300
    %v1151 = vunpack.c.l.b16 %v301
    %v1152 = vunpack.c.h.b16 %v301
    %v1153 = vunpack.c.l.b16 %v302
    %v1154 = vunpack.c.h.b16 %v302
    %v1155 = vunpack.c.l.b16 %v303
    %v1156 = vunpack.c.h.b16 %v303
    %v1157 = vunpack.c.l.b16 %v304
    %v1158 = vunpack.c.h.b16 %v304
    %v1159 = vunpack.c.l.b16 %v305
    %v1160 = vunpack.c.h.b16 %v305
    %v1161 = vunpack.c.l.b16 %v306
    %v1162 = vunpack.c.h.b16 %v306
    %v1163 = vunpack.c.l.b16 %v307
    %v1164 = vunpack.c.h.b16 %v307
    %v1165 = vunpack.c.l.b16 %v308
    %v1166 = vunpack.c.h.b16 %v308
    %v1167 = vunpack.c.l.b16 %v309
    %v1168 = vunpack.c.h.b16 %v309
    %v1169 = vunpack.c.l.b16 %v310
    %v1170 = vunpack.c.h.b16 %v310
    %v1171 = vunpack.c.l.b16 %v311
    %v1172 = vunpack.c.h.b16 %v311
    %v1173 = vunpack.c.l.b16 %v312
    %v1174 = vunpack.c.h.b16 %v312
    %v1175 = vunpack.c.l.b16 %v313
    %v1176 = vunpack.c.h.b16 %v313
    %v1177 = vunpack.c.l.b16 %v314
    %v1178 = vunpack.c.h.b16 %v314
    %v1179 = vunpack.c.l.b16 %v315
    %v1180 = vunpack.c.h.b16 %v315
    %v1181 = vunpack.c.l.b16 %v316
    %v1182 = vunpack.c.h.b16 %v316
    %v1183 = vunpack.c.l.b16 %v317
    %v1184 = vunpack.c.h.b16 %v317
    %v1185 = vunpack.c.l.b16 %v318
    %v1186 = vunpack.c.h.b16 %v318
    %v1187 = vunpack.c.l.b16 %v319
    %v1188 = vunpack.c.h.b16 %v319
    %v1189 = vunpack.c.l.b16 %v320
    %v1190 = vunpack.c.h.b16 %v320
    %v1191 = vunpack.c.l.b16 %v321
    %v1192 = vunpack.c.h.b16 %v321
    %v1193 = vunpack.c.l.b16 %v322
    %v1194 = vunpack.c.h.b16 %v322
    %v1195 = vunpack.c.l.b16 %v323
    %v1196 = vunpack.c.h.b16 %v323
    %v1197 = vpack.c.b16 %v1039, %v1037
    %v1198 = vpack.c.b16 %v1040, %v1038
    %v1199 = vpack.c.b16 %v1043, %v1041
    %v1200 = vpack.c.b16 %v1044, %v1042
    %v1201 = vpack.c.b16 %v1047, %v1045
    %v1202 = vpack.c.b16 %v1048, %v1046
    %v1203 = vpack.c.b16 %v1051, %v1049
    %v1204 = vpack.c.b16 %v1052, %v1050
    %v1205 = vpack.c.b16 %v1055, %v1053
    %v1206 = vpack.c.b16 %v1056, %v1054
    %v1207 = vpack.c.b16 %v1059, %v1057
    %v1208 = vpack.c.b16 %v1060, %v1058
    %v1209 = vpack.c.b16 %v1063, %v1061
    %v1210 = vpack.c.b16 %v1064, %v1062
    %v1211 = vpack.c.b16 %v1067, %v1065
    %v1212 = vpack.c.b16 %v1068, %v1066
    %v1213 = vpack.c.b16 %v1071, %v1069
    %v1214 = vpack.c.b16 %v1072, %v1070
    %v1215 = vpack.c.b16 %v1075, %v1073
    %v1216 = vpack.c.b16 %v1076, %v1074
    %v1217 = vpack.c.b16 %v1079, %v1077
    %v1218 = vpack.c.b16 %v1080, %v1078
    %v1219 = vpack.c.b16 %v1083, %v1081
    %v1220 = vpack.c.b16 %v1084, %v1082
    %v1221 = vpack.c.b16 %v1087, %v1085
    %v1222 = vpack.c.b16 %v1088, %v1086
    %v1223 = vpack.c.b16 %v1091, %v1089
    %v1224 = vpack.c.b16 %v1092, %v1090
    %v1225 = vpack.c.b16 %v1095, %v1093
    %v1226 = vpack.c.b16 %v1096, %v1094
    %v1227 = vpack.c.b16 %v1099, %v1097
    %v1228 = vpack.c.b16 %v1100, %v1098
    %v1229 = vpack.c.b16 %v1103, %v1101
    %v1230 = vpack.c.b16 %v1104, %v1102
    %v1231 = vpack.c.b16 %v1107, %v1105
    %v1232 = vpack.c.b16 %v1108, %v1106
    %v1233 = vpack.c.b16 %v1111, %v1109
    %v1234 = vpack.c.b16 %v1112, %v1110
    %v1235 = vpack.c.b16 %v1115, %v1113
    %v1236 = vpack.c.b16 %v1116, %v1114
    %v1237 = vpack.c.b16 %v1119, %v1117
    %v1238 = vpack.c.b16 %v1120, %v1118
    %v1239 = vpack.c.b16 %v1123, %v1121
    %v1240 = vpack.c.b16 %v1124, %v1122
    %v1241 = vpack.c.b16 %v1127, %v1125
    %v1242 = vpack.c.b16 %v1128, %v1126
    %v1243 = vpack.c.b16 %v1131, %v1129
    %v1244 = vpack.c.b16 %v1132, %v1130
    %v1245 = vpack.c.b16 %v1135, %v1133
    %v1246 = vpack.c.b16 %v1136, %v1134
    %v1247 = vpack.c.b16 %v1139, %v1137
    %v1248 = vpack.c.b16 %v1140, %v1138
    %v1249 = vpack.c.b16 %v1143, %v1141
    %v1250 = vpack.c.b16 %v1144, %v1142
    %v1251 = vpack.c.b16 %v1147, %v1145
    %v1252 = vpack.c.b16 %v1148, %v1146
    %v1253 = vpack.c.b16 %v1151, %v1149
    %v1254 = vpack.c.b16 %v1152, %v1150
    %v1255 = vpack.c.b16 %v1155, %v1153
    %v1256 = vpack.c.b16 %v1156, %v1154
    %v1257 = vpack.c.b16 %v1159, %v1157
    %v1258 = vpack.c.b16 %v1160, %v1158
    %v1259 = vpack.c.b16 %v1163, %v1161
    %v1260 = vpack.c.b16 %v1164, %v1162
    %v1261 = vpack.c.b16 %v1167, %v1165
    %v1262 = vpack.c.b16 %v1168, %v1166
    %v1263 = vpack.c.b16 %v1171, %v1169
    %v1264 = vpack.c.b16 %v1172, %v1170
    %v1265 = vpack.c.b16 %v1175, %v1173
    %v1266 = vpack.c.b16 %v1176, %v1174
    %v1267 = vpack.c.b16 %v1179, %v1177
    %v1268 = vpack.c.b16 %v1180, %v1178
    %v1269 = vpack.c.b16 %v1183, %v1181
    %v1270 = vpack.c.b16 %v1184, %v1182
    %v1271 = vpack.c.b16 %v1187, %v1185
    %v1272 = vpack.c.b16 %v1188, %v1186
    %v1273 = vpack.c.b16 %v1191, %v1189
    %v1274 = vpack.c.b16 %v1192, %v1190
    %v1275 = vpack.c.b16 %v1195, %v1193
    %v1276 = vpack.c.b16 %v1196, %v1194
    %1357 = vmatpush.bf16.msra.mxu0 %v1211
    %1358 = vmatpush.bf16.msra.mxu0 %v1209
    %1359 = vmatpush.bf16.msra.mxu0 %v1207
    %1360 = vmatpush.bf16.msra.mxu0 %v1205
    %1361 = vmatpush.bf16.msra.mxu0 %v1203
    %1362 = vmatpush.bf16.msra.mxu0 %v1201
    %1363 = vmatpush.bf16.msra.mxu0 %v1199
    %1364 = vmatpush.bf16.msra.mxu0 %v1197
    %1365 = vmatmul.bf16.gmra.mxu0 %v947
    %v1366 = vpop.f32.mrf.mxu0
    %v1367 = vadd.f32 %v871, %v1366
    %v1368 = vpop.f32.mrf.mxu0
    %1369 = vdwg.mxu0
    %1370 = vmatpush.bf16.msra.mxu0 %v1227
    %1371 = vmatpush.bf16.msra.mxu0 %v1225
    %1372 = vmatpush.bf16.msra.mxu0 %v1223
    %1373 = vmatpush.bf16.msra.mxu0 %v1221
    %1374 = vmatpush.bf16.msra.mxu0 %v1219
    %1375 = vmatpush.bf16.msra.mxu0 %v1217
    %1376 = vmatpush.bf16.msra.mxu0 %v1215
    %1377 = vmatpush.bf16.msra.mxu0 %v1213
    %1378 = vmatmul.bf16.gmra.mxu0 %v948
    %v1379 = vpop.f32.mrf.mxu0
    %v1380 = vadd.f32 %v1367, %v1379
    %v1381 = vpop.f32.mrf.mxu0
    %1382 = vdwg.mxu0
    %1383 = vmatpush.bf16.msra.mxu0 %v1243
    %1384 = vmatpush.bf16.msra.mxu0 %v1241
    %1385 = vmatpush.bf16.msra.mxu0 %v1239
    %1386 = vmatpush.bf16.msra.mxu0 %v1237
    %1387 = vmatpush.bf16.msra.mxu0 %v1235
    %1388 = vmatpush.bf16.msra.mxu0 %v1233
    %1389 = vmatpush.bf16.msra.mxu0 %v1231
    %1390 = vmatpush.bf16.msra.mxu0 %v1229
    %1391 = vmatmul.bf16.gmra.mxu0 %v949
    %v1392 = vpop.f32.mrf.mxu0
    %v1393 = vadd.f32 %v1380, %v1392
    %v1394 = vpop.f32.mrf.mxu0
    %1395 = vdwg.mxu0
    %1396 = vmatpush.bf16.msra.mxu0 %v1259
    %1397 = vmatpush.bf16.msra.mxu0 %v1257
    %1398 = vmatpush.bf16.msra.mxu0 %v1255
    %1399 = vmatpush.bf16.msra.mxu0 %v1253
    %1400 = vmatpush.bf16.msra.mxu0 %v1251
    %1401 = vmatpush.bf16.msra.mxu0 %v1249
    %1402 = vmatpush.bf16.msra.mxu0 %v1247
    %1403 = vmatpush.bf16.msra.mxu0 %v1245
    %1404 = vmatmul.bf16.gmra.mxu0 %v950
    %v1405 = vpop.f32.mrf.mxu0
    %v1406 = vadd.f32 %v1393, %v1405
    %v1407 = vpop.f32.mrf.mxu0
    %1408 = vdwg.mxu0
    %1409 = vmatpush.bf16.msra.mxu0 %v1275
    %1410 = vmatpush.bf16.msra.mxu0 %v1273
    %1411 = vmatpush.bf16.msra.mxu0 %v1271
    %1412 = vmatpush.bf16.msra.mxu0 %v1269
    %1413 = vmatpush.bf16.msra.mxu0 %v1267
    %1414 = vmatpush.bf16.msra.mxu0 %v1265
    %1415 = vmatpush.bf16.msra.mxu0 %v1263
    %1416 = vmatpush.bf16.msra.mxu0 %v1261
    %1417 = vmatmul.bf16.gmra.mxu0 %v951
    %v1418 = vpop.f32.mrf.mxu0
    %v1419 = vadd.f32 %v1406, %v1418
    %v1420 = vpop.f32.mrf.mxu0
    %1421 = vdwg.mxu0
    %1422 = vmatpush.bf16.msra.mxu0 %v1212
    %1423 = vmatpush.bf16.msra.mxu0 %v1210
    %1424 = vmatpush.bf16.msra.mxu0 %v1208
    %1425 = vmatpush.bf16.msra.mxu0 %v1206
    %1426 = vmatpush.bf16.msra.mxu0 %v1204
    %1427 = vmatpush.bf16.msra.mxu0 %v1202
    %1428 = vmatpush.bf16.msra.mxu0 %v1200
    %1429 = vmatpush.bf16.msra.mxu0 %v1198
    %1430 = vmatmul.bf16.gmra.mxu0 %v947
    %v1431 = vpop.f32.mrf.mxu0
    %v1432 = vadd.f32 %v936, %v1431
    %v1433 = vpop.f32.mrf.mxu0
    %1434 = vdwg.mxu0
    %1435 = vmatpush.bf16.msra.mxu0 %v1228
    %1436 = vmatpush.bf16.msra.mxu0 %v1226
    %1437 = vmatpush.bf16.msra.mxu0 %v1224
    %1438 = vmatpush.bf16.msra.mxu0 %v1222
    %1439 = vmatpush.bf16.msra.mxu0 %v1220
    %1440 = vmatpush.bf16.msra.mxu0 %v1218
    %1441 = vmatpush.bf16.msra.mxu0 %v1216
    %1442 = vmatpush.bf16.msra.mxu0 %v1214
    %1443 = vmatmul.bf16.gmra.mxu0 %v948
    %v1444 = vpop.f32.mrf.mxu0
    %v1445 = vadd.f32 %v1432, %v1444
    %v1446 = vpop.f32.mrf.mxu0
    %1447 = vdwg.mxu0
    %1448 = vmatpush.bf16.msra.mxu0 %v1244
    %1449 = vmatpush.bf16.msra.mxu0 %v1242
    %1450 = vmatpush.bf16.msra.mxu0 %v1240
    %1451 = vmatpush.bf16.msra.mxu0 %v1238
    %1452 = vmatpush.bf16.msra.mxu0 %v1236
    %1453 = vmatpush.bf16.msra.mxu0 %v1234
    %1454 = vmatpush.bf16.msra.mxu0 %v1232
    %1455 = vmatpush.bf16.msra.mxu0 %v1230
    %1456 = vmatmul.bf16.gmra.mxu0 %v949
    %v1457 = vpop.f32.mrf.mxu0
    %v1458 = vadd.f32 %v1445, %v1457
    %v1459 = vpop.f32.mrf.mxu0
    %1460 = vdwg.mxu0
    %1461 = vmatpush.bf16.msra.mxu0 %v1260
    %1462 = vmatpush.bf16.msra.mxu0 %v1258
    %1463 = vmatpush.bf16.msra.mxu0 %v1256
    %1464 = vmatpush.bf16.msra.mxu0 %v1254
    %1465 = vmatpush.bf16.msra.mxu0 %v1252
    %1466 = vmatpush.bf16.msra.mxu0 %v1250
    %1467 = vmatpush.bf16.msra.mxu0 %v1248
    %1468 = vmatpush.bf16.msra.mxu0 %v1246
    %1469 = vmatmul.bf16.gmra.mxu0 %v950
    %v1470 = vpop.f32.mrf.mxu0
    %v1471 = vadd.f32 %v1458, %v1470
    %v1472 = vpop.f32.mrf.mxu0
    %1473 = vdwg.mxu0
    %1474 = vmatpush.bf16.msra.mxu0 %v1276
    %1475 = vmatpush.bf16.msra.mxu0 %v1274
    %1476 = vmatpush.bf16.msra.mxu0 %v1272
    %1477 = vmatpush.bf16.msra.mxu0 %v1270
    %1478 = vmatpush.bf16.msra.mxu0 %v1268
    %1479 = vmatpush.bf16.msra.mxu0 %v1266
    %1480 = vmatpush.bf16.msra.mxu0 %v1264
    %1481 = vmatpush.bf16.msra.mxu0 %v1262
    %1482 = vmatmul.bf16.gmra.mxu0 %v951
    %v1483 = vpop.f32.mrf.mxu0
    %v1484 = vadd.f32 %v1471, %v1483
    %v1485 = vpop.f32.mrf.mxu0
    %1486 = vdwg.mxu0
    %v1487 = vld [vmem:[%s6] sm:$0x3]
    %v1489 = vperm.slane %v1487, 0
    %v1490 = vperm.slane %v1487, 1
    %v1493 = vadd.f32 %v1419, %v1489
    %v1494 = vadd.f32 %v1484, %v1490
    %v1495 = vld [vmem:[#allocation2] sm:$0xf]
    %v1496 = vunpack.c.l.bf16 %v1495
    %v1497 = vld [vmem:[%s4] sm:$0x3]
    %v1498 = vunpack.c.l.bf16 %v1497
    %1500 = vset.pattern.permute.xlu0 0
    %1501 = vperm.xlu0 %1500, %v1496
    %v1502 = vpop.permute.xlu0 %1501
    %v1505 = vperm.slane %v1498, 0
    %v1506 = vperm.slane %v1498, 2
    %v1509 = vperm.slane %v1505, 0
    %v1510 = vperm.slane %v1506, 0
    %v1511 = vmul.f32 %v1502, %v1509
    %v1512 = vmul.f32 %v1502, %v1510
    %v1513 = vadd.f32 %v1493, %v1511
    %v1514 = vadd.f32 %v1494, %v1512
    %1515 = vset.pattern.permute.xlu0 1
    %1516 = vperm.xlu0 %1515, %v1496
    %v1517 = vpop.permute.xlu0 %1516
    %v1519 = vperm.slane %v1498, 1
    %v1520 = vperm.slane %v1498, 3
    %v1523 = vperm.slane %v1519, 1
    %v1524 = vperm.slane %v1520, 1
    %v1525 = vmul.f32 %v1517, %v1523
    %v1526 = vmul.f32 %v1517, %v1524
    %v1527 = vadd.f32 %v1513, %v1525
    %v1528 = vadd.f32 %v1514, %v1526
    %v1529 = vmax.f32 %v1527, 0.0
    %v1530 = vmax.f32 %v1528, 0.0
    %v1531 = vpack.c.bf16 %v1529, %v1529
    %v1532 = vpack.c.bf16 %v1530, %v1530
    %v1533 = vld [vmem:[%s7] sm:$0xff]
    %v1534 = vld [vmem:[%s7 + $0x8] sm:$0xf]
    %v1535 = vld [vmem:[%s7 + $0xc] sm:$0xff]
    %v1536 = vld [vmem:[%s7 + $0x14] sm:$0xf]
    %v1537 = vld [vmem:[%s7 + $0x18] sm:$0xff]
    %v1538 = vld [vmem:[%s7 + $0x20] sm:$0xf]
    %v1539 = vld [vmem:[%s7 + $0x24] sm:$0xff]
    %v1540 = vld [vmem:[%s7 + $0x2c] sm:$0xf]
    %v1541 = vld [vmem:[%s7 + $0x30] sm:$0xff]
    %v1542 = vld [vmem:[%s7 + $0x38] sm:$0xf]
    %v1543 = vld [vmem:[%s7 + $0x3c] sm:$0xff]
    %v1544 = vld [vmem:[%s7 + $0x44] sm:$0xf]
    %v1545 = vld [vmem:[%s7 + $0x48] sm:$0xff]
    %v1546 = vld [vmem:[%s7 + $0x50] sm:$0xf]
    %v1547 = vld [vmem:[%s7 + $0x54] sm:$0xff]
    %v1548 = vld [vmem:[%s7 + $0x5c] sm:$0xf]
    %v1549 = vld [vmem:[%s7 + $0x60] sm:$0xff]
    %v1550 = vld [vmem:[%s7 + $0x68] sm:$0xf]
    %v1551 = vld [vmem:[%s7 + $0x6c] sm:$0xff]
    %v1552 = vld [vmem:[%s7 + $0x74] sm:$0xf]
    %v1553 = vld [vmem:[%s7 + $0x78] sm:$0xff]
    %v1554 = vld [vmem:[%s7 + $0x80] sm:$0xf]
    %v1555 = vld [vmem:[%s7 + $0x84] sm:$0xff]
    %v1556 = vld [vmem:[%s7 + $0x8c] sm:$0xf]
    %v1557 = vld [vmem:[%s7 + $0x90] sm:$0xff]
    %v1558 = vld [vmem:[%s7 + $0x98] sm:$0xf]
    %v1559 = vld [vmem:[%s7 + $0x9c] sm:$0xff]
    %v1560 = vld [vmem:[%s7 + $0xa4] sm:$0xf]
    %v1561 = vld [vmem:[%s7 + $0xa8] sm:$0xff]
    %v1562 = vld [vmem:[%s7 + $0xb0] sm:$0xf]
    %v1563 = vld [vmem:[%s7 + $0xb4] sm:$0xff]
    %v1564 = vld [vmem:[%s7 + $0xbc] sm:$0xf]
    %v1565 = vld [vmem:[%s7 + $0xc0] sm:$0xff]
    %v1566 = vld [vmem:[%s7 + $0xc8] sm:$0xf]
    %v1567 = vld [vmem:[%s7 + $0xcc] sm:$0xff]
    %v1568 = vld [vmem:[%s7 + $0xd4] sm:$0xf]
    %v1569 = vld [vmem:[%s7 + $0xd8] sm:$0xff]
    %v1570 = vld [vmem:[%s7 + $0xe0] sm:$0xf]
    %v1571 = vld [vmem:[%s7 + $0xe4] sm:$0xff]
    %v1572 = vld [vmem:[%s7 + $0xec] sm:$0xf]
    %v1573 = vld [vmem:[%s7 + $0xf0] sm:$0xff]
    %v1574 = vld [vmem:[%s7 + $0xf8] sm:$0xf]
    %v1575 = vld [vmem:[%s7 + $0xfc] sm:$0xff]
    %v1576 = vld [vmem:[%s7 + $0x104] sm:$0xf]
    %v1577 = vld [vmem:[%s7 + $0x108] sm:$0xff]
    %v1578 = vld [vmem:[%s7 + $0x110] sm:$0xf]
    %v1579 = vld [vmem:[%s7 + $0x114] sm:$0xff]
    %v1580 = vld [vmem:[%s7 + $0x11c] sm:$0xf]
    %v1581 = vld [vmem:[%s7 + $0x120] sm:$0xff]
    %v1582 = vld [vmem:[%s7 + $0x128] sm:$0xf]
    %v1583 = vld [vmem:[%s7 + $0x12c] sm:$0xff]
    %v1584 = vld [vmem:[%s7 + $0x134] sm:$0xf]
    %v1585 = vld [vmem:[%s7 + $0x138] sm:$0xff]
    %v1586 = vld [vmem:[%s7 + $0x140] sm:$0xf]
    %v1587 = vld [vmem:[%s7 + $0x144] sm:$0xff]
    %v1588 = vld [vmem:[%s7 + $0x14c] sm:$0xf]
    %v1589 = vld [vmem:[%s7 + $0x150] sm:$0xff]
    %v1590 = vld [vmem:[%s7 + $0x158] sm:$0xf]
    %v1591 = vld [vmem:[%s7 + $0x15c] sm:$0xff]
    %v1592 = vld [vmem:[%s7 + $0x164] sm:$0xf]
    %v1593 = vld [vmem:[%s7 + $0x168] sm:$0xff]
    %v1594 = vld [vmem:[%s7 + $0x170] sm:$0xf]
    %v1595 = vld [vmem:[%s7 + $0x174] sm:$0xff]
    %v1596 = vld [vmem:[%s7 + $0x17c] sm:$0xf]
    %v1597 = vld [vmem:[%s8] sm:$0x7]
    %v1599 = vperm.slane %v1597, 0
    %v1600 = vperm.slane %v1597, 1
    %v1601 = vperm.slane %v1597, 2
    %v1669 = vunpack.c.l.b16 %v1533
    %v1670 = vunpack.c.h.b16 %v1533
    %v1671 = vunpack.c.l.b16 %v1534
    %v1672 = vunpack.c.l.b16 %v1535
    %v1673 = vunpack.c.h.b16 %v1535
    %v1674 = vunpack.c.l.b16 %v1536
    %v1675 = vunpack.c.l.b16 %v1537
    %v1676 = vunpack.c.h.b16 %v1537
    %v1677 = vunpack.c.l.b16 %v1538
    %v1678 = vunpack.c.l.b16 %v1539
    %v1679 = vunpack.c.h.b16 %v1539
    %v1680 = vunpack.c.l.b16 %v1540
    %v1681 = vunpack.c.l.b16 %v1541
    %v1682 = vunpack.c.h.b16 %v1541
    %v1683 = vunpack.c.l.b16 %v1542
    %v1684 = vunpack.c.l.b16 %v1543
    %v1685 = vunpack.c.h.b16 %v1543
    %v1686 = vunpack.c.l.b16 %v1544
    %v1687 = vunpack.c.l.b16 %v1545
    %v1688 = vunpack.c.h.b16 %v1545
    %v1689 = vunpack.c.l.b16 %v1546
    %v1690 = vunpack.c.l.b16 %v1547
    %v1691 = vunpack.c.h.b16 %v1547
    %v1692 = vunpack.c.l.b16 %v1548
    %v1693 = vunpack.c.l.b16 %v1549
    %v1694 = vunpack.c.h.b16 %v1549
    %v1695 = vunpack.c.l.b16 %v1550
    %v1696 = vunpack.c.l.b16 %v1551
    %v1697 = vunpack.c.h.b16 %v1551
    %v1698 = vunpack.c.l.b16 %v1552
    %v1699 = vunpack.c.l.b16 %v1553
    %v1700 = vunpack.c.h.b16 %v1553
    %v1701 = vunpack.c.l.b16 %v1554
    %v1702 = vunpack.c.l.b16 %v1555
    %v1703 = vunpack.c.h.b16 %v1555
    %v1704 = vunpack.c.l.b16 %v1556
    %v1705 = vunpack.c.l.b16 %v1557
    %v1706 = vunpack.c.h.b16 %v1557
    %v1707 = vunpack.c.l.b16 %v1558
    %v1708 = vunpack.c.l.b16 %v1559
    %v1709 = vunpack.c.h.b16 %v1559
    %v1710 = vunpack.c.l.b16 %v1560
    %v1711 = vunpack.c.l.b16 %v1561
    %v1712 = vunpack.c.h.b16 %v1561
    %v1713 = vunpack.c.l.b16 %v1562
    %v1714 = vunpack.c.l.b16 %v1563
    %v1715 = vunpack.c.h.b16 %v1563
    %v1716 = vunpack.c.l.b16 %v1564
    %v1717 = vunpack.c.l.b16 %v1565
    %v1718 = vunpack.c.h.b16 %v1565
    %v1719 = vunpack.c.l.b16 %v1566
    %v1720 = vunpack.c.l.b16 %v1567
    %v1721 = vunpack.c.h.b16 %v1567
    %v1722 = vunpack.c.l.b16 %v1568
    %v1723 = vunpack.c.l.b16 %v1569
    %v1724 = vunpack.c.h.b16 %v1569
    %v1725 = vunpack.c.l.b16 %v1570
    %v1726 = vunpack.c.l.b16 %v1571
    %v1727 = vunpack.c.h.b16 %v1571
    %v1728 = vunpack.c.l.b16 %v1572
    %v1729 = vunpack.c.l.b16 %v1573
    %v1730 = vunpack.c.h.b16 %v1573
    %v1731 = vunpack.c.l.b16 %v1574
    %v1732 = vunpack.c.l.b16 %v1575
    %v1733 = vunpack.c.h.b16 %v1575
    %v1734 = vunpack.c.l.b16 %v1576
    %v1735 = vunpack.c.l.b16 %v1577
    %v1736 = vunpack.c.h.b16 %v1577
    %v1737 = vunpack.c.l.b16 %v1578
    %v1738 = vunpack.c.l.b16 %v1579
    %v1739 = vunpack.c.h.b16 %v1579
    %v1740 = vunpack.c.l.b16 %v1580
    %v1741 = vunpack.c.l.b16 %v1581
    %v1742 = vunpack.c.h.b16 %v1581
    %v1743 = vunpack.c.l.b16 %v1582
    %v1744 = vunpack.c.l.b16 %v1583
    %v1745 = vunpack.c.h.b16 %v1583
    %v1746 = vunpack.c.l.b16 %v1584
    %v1747 = vunpack.c.l.b16 %v1585
    %v1748 = vunpack.c.h.b16 %v1585
    %v1749 = vunpack.c.l.b16 %v1586
    %v1750 = vunpack.c.l.b16 %v1587
    %v1751 = vunpack.c.h.b16 %v1587
    %v1752 = vunpack.c.l.b16 %v1588
    %v1753 = vunpack.c.l.b16 %v1589
    %v1754 = vunpack.c.h.b16 %v1589
    %v1755 = vunpack.c.l.b16 %v1590
    %v1756 = vunpack.c.l.b16 %v1591
    %v1757 = vunpack.c.h.b16 %v1591
    %v1758 = vunpack.c.l.b16 %v1592
    %v1759 = vunpack.c.l.b16 %v1593
    %v1760 = vunpack.c.h.b16 %v1593
    %v1761 = vunpack.c.l.b16 %v1594
    %v1762 = vunpack.c.l.b16 %v1595
    %v1763 = vunpack.c.h.b16 %v1595
    %v1764 = vunpack.c.l.b16 %v1596
    %v1765 = vpack.c.b16 %v1672, %v1669
    %v1766 = vpack.c.b16 %v1673, %v1670
    %v1767 = vpack.c.b16 %v1674, %v1671
    %v1768 = vpack.c.b16 %v1678, %v1675
    %v1769 = vpack.c.b16 %v1679, %v1676
    %v1770 = vpack.c.b16 %v1680, %v1677
    %v1771 = vpack.c.b16 %v1684, %v1681
    %v1772 = vpack.c.b16 %v1685, %v1682
    %v1773 = vpack.c.b16 %v1686, %v1683
    %v1774 = vpack.c.b16 %v1690, %v1687
    %v1775 = vpack.c.b16 %v1691, %v1688
    %v1776 = vpack.c.b16 %v1692, %v1689
    %v1777 = vpack.c.b16 %v1696, %v1693
    %v1778 = vpack.c.b16 %v1697, %v1694
    %v1779 = vpack.c.b16 %v1698, %v1695
    %v1780 = vpack.c.b16 %v1702, %v1699
    %v1781 = vpack.c.b16 %v1703, %v1700
    %v1782 = vpack.c.b16 %v1704, %v1701
    %v1783 = vpack.c.b16 %v1708, %v1705
    %v1784 = vpack.c.b16 %v1709, %v1706
    %v1785 = vpack.c.b16 %v1710, %v1707
    %v1786 = vpack.c.b16 %v1714, %v1711
    %v1787 = vpack.c.b16 %v1715, %v1712
    %v1788 = vpack.c.b16 %v1716, %v1713
    %v1789 = vpack.c.b16 %v1720, %v1717
    %v1790 = vpack.c.b16 %v1721, %v1718
    %v1791 = vpack.c.b16 %v1722, %v1719
    %v1792 = vpack.c.b16 %v1726, %v1723
    %v1793 = vpack.c.b16 %v1727, %v1724
    %v1794 = vpack.c.b16 %v1728, %v1725
    %v1795 = vpack.c.b16 %v1732, %v1729
    %v1796 = vpack.c.b16 %v1733, %v1730
    %v1797 = vpack.c.b16 %v1734, %v1731
    %v1798 = vpack.c.b16 %v1738, %v1735
    %v1799 = vpack.c.b16 %v1739, %v1736
    %v1800 = vpack.c.b16 %v1740, %v1737
    %v1801 = vpack.c.b16 %v1744, %v1741
    %v1802 = vpack.c.b16 %v1745, %v1742
    %v1803 = vpack.c.b16 %v1746, %v1743
    %v1804 = vpack.c.b16 %v1750, %v1747
    %v1805 = vpack.c.b16 %v1751, %v1748
    %v1806 = vpack.c.b16 %v1752, %v1749
    %v1807 = vpack.c.b16 %v1756, %v1753
    %v1808 = vpack.c.b16 %v1757, %v1754
    %v1809 = vpack.c.b16 %v1758, %v1755
    %v1810 = vpack.c.b16 %v1762, %v1759
    %v1811 = vpack.c.b16 %v1763, %v1760
    %v1812 = vpack.c.b16 %v1764, %v1761
    %1861 = vmatpush.bf16.msra.mxu0 %v1786
    %1862 = vmatpush.bf16.msra.mxu0 %v1783
    %1863 = vmatpush.bf16.msra.mxu0 %v1780
    %1864 = vmatpush.bf16.msra.mxu0 %v1777
    %1865 = vmatpush.bf16.msra.mxu0 %v1774
    %1866 = vmatpush.bf16.msra.mxu0 %v1771
    %1867 = vmatpush.bf16.msra.mxu0 %v1768
    %1868 = vmatpush.bf16.msra.mxu0 %v1765
    %1869 = vmatmul.bf16.gmra.mxu0 %v1531
    %v1870 = vpop.f32.mrf.mxu0
    %v1871 = vadd.f32 %v1599, %v1870
    %v1872 = vpop.f32.mrf.mxu0
    %1873 = vdwg.mxu0
    %1874 = vmatpush.bf16.msra.mxu0 %v1810
    %1875 = vmatpush.bf16.msra.mxu0 %v1807
    %1876 = vmatpush.bf16.msra.mxu0 %v1804
    %1877 = vmatpush.bf16.msra.mxu0 %v1801
    %1878 = vmatpush.bf16.msra.mxu0 %v1798
    %1879 = vmatpush.bf16.msra.mxu0 %v1795
    %1880 = vmatpush.bf16.msra.mxu0 %v1792
    %1881 = vmatpush.bf16.msra.mxu0 %v1789
    %1882 = vmatmul.bf16.gmra.mxu0 %v1532
    %v1883 = vpop.f32.mrf.mxu0
    %v1884 = vadd.f32 %v1871, %v1883
    %v1885 = vpop.f32.mrf.mxu0
    %1886 = vdwg.mxu0
    %1887 = vmatpush.bf16.msra.mxu0 %v1787
    %1888 = vmatpush.bf16.msra.mxu0 %v1784
    %1889 = vmatpush.bf16.msra.mxu0 %v1781
    %1890 = vmatpush.bf16.msra.mxu0 %v1778
    %1891 = vmatpush.bf16.msra.mxu0 %v1775
    %1892 = vmatpush.bf16.msra.mxu0 %v1772
    %1893 = vmatpush.bf16.msra.mxu0 %v1769
    %1894 = vmatpush.bf16.msra.mxu0 %v1766
    %1895 = vmatmul.bf16.gmra.mxu0 %v1531
    %v1896 = vpop.f32.mrf.mxu0
    %v1897 = vadd.f32 %v1600, %v1896
    %v1898 = vpop.f32.mrf.mxu0
    %1899 = vdwg.mxu0
    %1900 = vmatpush.bf16.msra.mxu0 %v1811
    %1901 = vmatpush.bf16.msra.mxu0 %v1808
    %1902 = vmatpush.bf16.msra.mxu0 %v1805
    %1903 = vmatpush.bf16.msra.mxu0 %v1802
    %1904 = vmatpush.bf16.msra.mxu0 %v1799
    %1905 = vmatpush.bf16.msra.mxu0 %v1796
    %1906 = vmatpush.bf16.msra.mxu0 %v1793
    %1907 = vmatpush.bf16.msra.mxu0 %v1790
    %1908 = vmatmul.bf16.gmra.mxu0 %v1532
    %v1909 = vpop.f32.mrf.mxu0
    %v1910 = vadd.f32 %v1897, %v1909
    %v1911 = vpop.f32.mrf.mxu0
    %1912 = vdwg.mxu0
    %1913 = vmatpush.bf16.msra.mxu0 %v1788
    %1914 = vmatpush.bf16.msra.mxu0 %v1785
    %1915 = vmatpush.bf16.msra.mxu0 %v1782
    %1916 = vmatpush.bf16.msra.mxu0 %v1779
    %1917 = vmatpush.bf16.msra.mxu0 %v1776
    %1918 = vmatpush.bf16.msra.mxu0 %v1773
    %1919 = vmatpush.bf16.msra.mxu0 %v1770
    %1920 = vmatpush.bf16.msra.mxu0 %v1767
    %1921 = vmatmul.bf16.gmra.mxu0 %v1531
    %v1922 = vpop.f32.mrf.mxu0
    %v1923 = vadd.f32 %v1601, %v1922
    %v1924 = vpop.f32.mrf.mxu0
    %1925 = vdwg.mxu0
    %1926 = vmatpush.bf16.msra.mxu0 %v1812
    %1927 = vmatpush.bf16.msra.mxu0 %v1809
    %1928 = vmatpush.bf16.msra.mxu0 %v1806
    %1929 = vmatpush.bf16.msra.mxu0 %v1803
    %1930 = vmatpush.bf16.msra.mxu0 %v1800
    %1931 = vmatpush.bf16.msra.mxu0 %v1797
    %1932 = vmatpush.bf16.msra.mxu0 %v1794
    %1933 = vmatpush.bf16.msra.mxu0 %v1791
    %1934 = vmatmul.bf16.gmra.mxu0 %v1532
    %v1935 = vpop.f32.mrf.mxu0
    %v1936 = vadd.f32 %v1923, %v1935
    %v1937 = vpop.f32.mrf.mxu0
    %1938 = vdwg.mxu0
    %v1939 = vxor.u32 %v1884, 2147483648
    %v1940 = vmul.f32 %v1939, 1.442695
    %v1941 = vpow.pop %v1940
    %v1942 = vadd.f32 %v1941, 1.0
    %v1943 = vrcp.pop %v1942
    %v1944 = vmul.f32 %v1942, %v1943
    %v1945 = vsub.f32 1.0, %v1944
    %v1946 = vmul.f32 %v1943, %v1945
    %v1947 = vadd.f32 %v1943, %v1946
    %vm1948 = vweird.f32 %v1942
    %vm1949 = vweird.f32 %v1943
    %vm1950 = vmor %vm1948, %vm1949
    %v1951 = vsel %vm1950, %v1943, %v1947
    %v1952 = vand.u32 2147483647, %v1942
    %vm1953 = vcmp.eq.f32.partialorder %v1952, 8.507059e+37
    %v1954 = vand.u32 %v1942, 2147483648
    %v1955 = vor.u32 1.1754944e-38, %v1954
    %v1956 = vsel %vm1953, %v1955, %v1951
    %v1957 = vmul.f32 1.0, %v1956
    %v1958 = vtanh.pop %v1910
    %v1959 = vxor.u32 %v1936, 2147483648
    %v1960 = vmul.f32 %v1959, 1.442695
    %v1961 = vpow.pop %v1960
    %v1962 = vadd.f32 %v1961, 1.0
    %v1963 = vrcp.pop %v1962
    %v1964 = vmul.f32 %v1962, %v1963
    %v1965 = vsub.f32 1.0, %v1964
    %v1966 = vmul.f32 %v1963, %v1965
    %v1967 = vadd.f32 %v1963, %v1966
    %vm1968 = vweird.f32 %v1962
    %vm1969 = vweird.f32 %v1963
    %vm1970 = vmor %vm1968, %vm1969
    %v1971 = vsel %vm1970, %v1963, %v1967
    %v1972 = vand.u32 2147483647, %v1962
    %vm1973 = vcmp.eq.f32.partialorder %v1972, 8.507059e+37
    %v1974 = vand.u32 %v1962, 2147483648
    %v1975 = vor.u32 1.1754944e-38, %v1974
    %v1976 = vsel %vm1973, %v1975, %v1971
    %v1977 = vmul.f32 1.0, %v1976
    %v1978 = vmul.f32 %v1957, %v1958
    %v1979 = vtanh.pop %v1978
    %v1980 = vmul.f32 %v1977, %v1979
    %v1981 = vmax.f32 %v1980, 0.0
    %v1982 = vpack.c.bf16 %v1981, %v1981
    %v1983 = vld [vmem:[%s9] sm:$0xf]
    %v1984 = vld [vmem:[%s9 + $0x4] sm:$0xf]
    %v1985 = vld [vmem:[%s9 + $0x8] sm:$0xf]
    %v1986 = vld [vmem:[%s9 + $0xc] sm:$0xf]
    %v1987 = vld [vmem:[%s9 + $0x10] sm:$0xf]
    %v1988 = vld [vmem:[%s9 + $0x14] sm:$0xf]
    %v1989 = vld [vmem:[%s9 + $0x18] sm:$0xf]
    %v1990 = vld [vmem:[%s9 + $0x1c] sm:$0xf]
    %v1991 = vld [vmem:[%s9 + $0x20] sm:$0xf]
    %v1992 = vld [vmem:[%s9 + $0x24] sm:$0xf]
    %v1993 = vld [vmem:[%s9 + $0x28] sm:$0xf]
    %v1994 = vld [vmem:[%s9 + $0x2c] sm:$0xf]
    %v1995 = vld [vmem:[%s9 + $0x30] sm:$0xf]
    %v1996 = vld [vmem:[%s9 + $0x34] sm:$0xf]
    %v1997 = vld [vmem:[%s9 + $0x38] sm:$0xf]
    %v1998 = vld [vmem:[%s9 + $0x3c] sm:$0xf]
    %v1999 = vld [vmem:[%s10] sm:$0x1]
    %v2001 = vperm.slane %v1999, 0
    %v2019 = vunpack.c.l.b16 %v1983
    %v2020 = vunpack.c.l.b16 %v1984
    %v2021 = vunpack.c.l.b16 %v1985
    %v2022 = vunpack.c.l.b16 %v1986
    %v2023 = vunpack.c.l.b16 %v1987
    %v2024 = vunpack.c.l.b16 %v1988
    %v2025 = vunpack.c.l.b16 %v1989
    %v2026 = vunpack.c.l.b16 %v1990
    %v2027 = vunpack.c.l.b16 %v1991
    %v2028 = vunpack.c.l.b16 %v1992
    %v2029 = vunpack.c.l.b16 %v1993
    %v2030 = vunpack.c.l.b16 %v1994
    %v2031 = vunpack.c.l.b16 %v1995
    %v2032 = vunpack.c.l.b16 %v1996
    %v2033 = vunpack.c.l.b16 %v1997
    %v2034 = vunpack.c.l.b16 %v1998
    %v2035 = vpack.c.b16 %v2020, %v2019
    %v2036 = vpack.c.b16 %v2022, %v2021
    %v2037 = vpack.c.b16 %v2024, %v2023
    %v2038 = vpack.c.b16 %v2026, %v2025
    %v2039 = vpack.c.b16 %v2028, %v2027
    %v2040 = vpack.c.b16 %v2030, %v2029
    %v2041 = vpack.c.b16 %v2032, %v2031
    %v2042 = vpack.c.b16 %v2034, %v2033
    %2051 = vmatpush.bf16.msra.mxu0 %v2042
    %2052 = vmatpush.bf16.msra.mxu0 %v2041
    %2053 = vmatpush.bf16.msra.mxu0 %v2040
    %2054 = vmatpush.bf16.msra.mxu0 %v2039
    %2055 = vmatpush.bf16.msra.mxu0 %v2038
    %2056 = vmatpush.bf16.msra.mxu0 %v2037
    %2057 = vmatpush.bf16.msra.mxu0 %v2036
    %2058 = vmatpush.bf16.msra.mxu0 %v2035
    %2059 = vmatmul.bf16.gmra.mxu0 %v1982
    %v2060 = vpop.f32.mrf.mxu0
    %v2061 = vadd.f32 %v2001, %v2060
    %v2062 = vpop.f32.mrf.mxu0
    %2063 = vdwg.mxu0
    %v2064 = vxor.u32 %v2061, 2147483648
    %v2065 = vmul.f32 %v2064, 1.442695
    %v2066 = vpow.pop %v2065
    %v2067 = vadd.f32 %v2066, 1.0
    %v2068 = vrcp.pop %v2067
    %v2069 = vmul.f32 %v2067, %v2068
    %v2070 = vsub.f32 1.0, %v2069
    %v2071 = vmul.f32 %v2068, %v2070
    %v2072 = vadd.f32 %v2068, %v2071
    %vm2073 = vweird.f32 %v2067
    %vm2074 = vweird.f32 %v2068
    %vm2075 = vmor %vm2073, %vm2074
    %v2076 = vsel %vm2075, %v2068, %v2072
    %v2077 = vand.u32 2147483647, %v2067
    %vm2078 = vcmp.eq.f32.partialorder %v2077, 8.507059e+37
    %v2079 = vand.u32 %v2067, 2147483648
    %v2080 = vor.u32 1.1754944e-38, %v2079
    %v2081 = vsel %vm2078, %v2080, %v2076
    %v2082 = vmul.f32 1.0, %v2081
    %v2083 = vtanh.pop %v2061
    %2085 = vrot.lane.b32.xlu0 %v2083, 112
    %v2086 = vpop.permute.xlu0 %2085
    %v2088 = vmul.f32 %v2082, %v2086
    %v2089 = vtanh.pop %v2088
    %2091 = vrot.lane.b32.xlu0 %v2089, 32
    %v2092 = vpop.permute.xlu0 %2091
    %v2094 = vmul.f32 %v2082, %v2092
    %v2095 = vmax.f32 %v2094, 0.0
    %v2096 = vld [vmem:[%s11] sm:$0xff]
    %v2097 = vld [vmem:[%s11 + $0x8] sm:$0xff]
    %v2098 = vld [vmem:[%s12] sm:$0x1]
    %v2100 = vperm.slane %v2098, 0
    %2103 = vrot.lane.b32.xlu0 %v2095, 96
    %v2104 = vpop.permute.xlu0 %2103
    %vm2105 = vcmask 130048
    %v2106 = vsel %vm2105, %v2104, 0
    %2108 = vmatpush.msra.mxu0 0.0
    %2109 = vmatpush.msra.mxu0 0.0
    %2110 = vmatpush.msra.mxu0 0.0
    %2111 = vmatpush.msra.mxu0 0.0
    %2112 = vmatpush.msra.mxu0 0.0
    %2113 = vmatpush.msra.mxu0 0.0
    %2114 = vmatpush.msra.mxu0 0.0
    %2115 = vmatpush.msra.mxu0 0.0
    %2116 = vmatpush.msra.mxu0 0.0
    %2117 = vmatpush.msra.mxu0 0.0
    %2118 = vmatpush.msra.mxu0 0.0
    %2119 = vmatpush.msra.mxu0 0.0
    %2120 = vmatpush.msra.mxu0 0.0
    %2121 = vmatpush.msra.mxu0 0.0
    %2122 = vmatpush.msra.mxu0 %v2097
    %2123 = vmatpush.msra.mxu0 %v2096
    %2124 = vmatmul.f32.gmra.mxu0 %v2106
    %v2125 = vpop.f32.mrf.mxu0
    %v2126 = vadd.f32 %v2100, %v2125
    %2127 = vdwg.mxu0
    %vm2128 = vcmask 23552
    %2129 = vst.msk [vmem:[%s17] sm:$0xff] %vm2128, %v2126
    // Predicated region
    $region66: #{custom_lstm_forward.2} parent=1 // pred_check
      _
    $region67: #{custom_lstm_forward.2} parent=1 // pred_check_branch
      %2131 = sbr.rel (0) target = $region69
    $region68: #{custom_lstm_forward.2} parent=1 // pred_region
      _
    $region69: #{custom_lstm_forward.2} parent=1 // pred_fallthru
      _
    // Predicated region
    $region70: #{custom_lstm_forward.2} parent=1 // pred_check
      _
    $region71: #{custom_lstm_forward.2} parent=1 // pred_check_branch
      %2133 = sbr.rel (0) target = $region73
    $region72: #{custom_lstm_forward.2} parent=1 // pred_region
      _
    $region73: #{custom_lstm_forward.2} parent=1 // pred_fallthru
      _

</llo_original>
